<compile_context>
chip_gen: v6e
topology: v6e:2x2x1
jax: 0.10.0
libtpu: 0.0.40
codegen_flags: <defaults>
</compile_context>

<pallas_src>
import math
from collections import namedtuple

import numpy as np
import jax
import jax.numpy as jnp
from jax.experimental import pallas as pl
from jax.experimental.pallas import tpu as pltpu


# ----------------------------------------------------------------------------
# small helpers
# ----------------------------------------------------------------------------
def _round_up(x, m):
    return -(-int(x) // m) * m


def bev_spatial_shape(point_cloud_range, pillar_size):
    W = int(round((point_cloud_range[3] - point_cloud_range[0]) / pillar_size))
    H = int(round((point_cloud_range[4] - point_cloud_range[1]) / pillar_size))
    return W, H  # (bev_width, bev_height)


# ----------------------------------------------------------------------------
# Host glue: PillarQueryAndGroup equivalent (data-dependent grouping, NumPy)
# ----------------------------------------------------------------------------
def pillar_query_and_group(xyz, xyz_batch_cnt, pt_feature, pillar_size, pc_range):
    """NumPy re-implementation of PillarQueryAndGroup, points sorted by pillar id.

    Returns:
      pillar_indices     (M, 3) int32  [batch, y, x]
      set_indices_sorted (L,)   int32  pillar id per grouped point (non-decreasing)
      group_features     (L, C+3) f32  [point_features, xyz - pillar_center], sorted
      starts             (M+1,) int64  per-pillar start offsets into the sorted arrays
    """
    xyz = np.asarray(xyz, dtype=np.float32)
    pt = np.asarray(pt_feature, dtype=np.float32)
    cnt = np.asarray(xyz_batch_cnt, dtype=np.int64)
    W, H = bev_spatial_shape(pc_range, pillar_size)

    batch_ids = np.repeat(np.arange(cnt.shape[0], dtype=np.int64), cnt)
    px = np.floor((xyz[:, 0] - pc_range[0]) / pillar_size).astype(np.int64)
    py = np.floor((xyz[:, 1] - pc_range[1]) / pillar_size).astype(np.int64)
    valid = (px >= 0) & (px < W) & (py >= 0) & (py < H)

    key = batch_ids * (H * W) + py * W + px
    keys_v = key[valid]
    uniq, inv = np.unique(keys_v, return_inverse=True)
    M = uniq.shape[0]

    b = uniq // (H * W)
    rem = uniq % (H * W)
    y = rem // W
    x = rem % W
    pillar_indices = np.stack([b, y, x], axis=1).astype(np.int32)      # (M, 3) byx

    # pillar centers for each grouped point
    cx = (x[inv].astype(np.float32) + 0.5) * pillar_size + pc_range[0]
    cy = (y[inv].astype(np.float32) + 0.5) * pillar_size + pc_range[1]
    # TODO(synk): exact z-center convention of PillarQueryAndGroup (using mid-range z)
    cz = np.full_like(cx, 0.5 * (pc_range[2] + pc_range[5]), dtype=np.float32)
    centers = np.stack([cx, cy, cz], axis=1)

    xyz_v = xyz[valid]
    pt_v = pt[valid]
    group_features = np.concatenate([pt_v, xyz_v - centers], axis=1).astype(np.float32)

    # sort by pillar id so each pillar's points are contiguous
    order = np.argsort(inv, kind="stable")
    inv_sorted = inv[order].astype(np.int32)
    group_features = group_features[order]

    counts = np.bincount(inv_sorted, minlength=M)
    starts = np.zeros(M + 1, dtype=np.int64)
    if M > 0:
        starts[1:] = np.cumsum(counts)

    return pillar_indices, inv_sorted, group_features, starts


def choose_tiling(M, max_points_per_pillar, target_rows=16384):
    """Pick (P points/pillar, tm pillars/tile, num_tiles, M_pad)."""
    P = max(8, _round_up(max_points_per_pillar, 8))
    tm_cap = max(8, min(4096, (target_rows // P) // 8 * 8))
    num_tiles = max(1, -(-M // tm_cap))
    tm = _round_up(-(-M // num_tiles), 8)
    M_pad = tm * num_tiles
    return P, tm, num_tiles, M_pad


def densify_pillars(group_features_sorted, starts, M, M_pad, P, c_in_pad):
    """Pack sorted grouped points into a dense (M_pad*P, c_in_pad) row matrix.

    Pad slots of a pillar replicate one of its real points (max-neutral); pillars
    beyond M (padding rows) are zeros and are sliced away by the caller.
    """
    gf = np.asarray(group_features_sorted, np.float32)
    c_in = gf.shape[1]
    starts = np.asarray(starts, np.int64)
    counts = np.diff(starts)                                   # (M,), all >= 1
    p_idx = np.arange(P, dtype=np.int64)[None, :]              # (1, P)
    src = starts[:M, None] + np.minimum(p_idx, counts[:, None] - 1)   # (M, P)

    dense = np.zeros((M_pad, P, c_in_pad), np.float32)
    dense[:M, :, :c_in] = gf[src]
    return dense.reshape(M_pad * P, c_in_pad)


def fold_params(params, c_in_pad):
    """Fold BN scale into the Linear weights; zero-pad first layer input dim."""
    folded = []
    for li, (w, scale, bias) in enumerate(params):
        w = np.asarray(w, np.float32) * np.asarray(scale, np.float32)[None, :]
        if li == 0 and w.shape[0] < c_in_pad:
            pad = np.zeros((c_in_pad - w.shape[0], w.shape[1]), np.float32)
            w = np.concatenate([w, pad], axis=0)
        folded.append((w, np.asarray(bias, np.float32)))
    return folded


# ----------------------------------------------------------------------------
# Fused Pallas kernel: (Linear·BN folded + ReLU) x n_layers  +  per-pillar max
# ----------------------------------------------------------------------------
def _make_fused_kernel(n_layers, tm, P):
    def kernel(x_ref, *rest):
        # rest = [w1, b1, w2, b2, ..., o_ref]
        o_ref = rest[2 * n_layers]

        h = x_ref[...]                                            # (tm*P, c_in) bf16
        for li in range(n_layers):
            w_ref, b_ref = rest[2 * li], rest[2 * li + 1]
            y = jnp.dot(h, w_ref[...], preferred_element_type=jnp.float32)
            y = jnp.maximum(y + b_ref[...], 0.0)
            h = y.astype(jnp.bfloat16) if li + 1 < n_layers else y
        # h: (tm*P, c_out) f32

        c_out = h.shape[-1]
        # per-pillar max over the (replicate-padded) point axis
        o_ref[...] = jnp.max(h.reshape(tm, P, c_out), axis=1)

    return kernel


def fused_mlp_pillar_max(dense_rows, folded_params, M, M_pad, P, tm):
    """Fused shared-MLP + per-pillar max over dense (M_pad*P, c_in) rows."""
    rows, c_in = dense_rows.shape
    assert rows == M_pad * P and M_pad % tm == 0
    n_layers = len(folded_params)
    c_out = int(folded_params[-1][0].shape[1])
    num_tiles = M_pad // tm

    in_specs = [pl.BlockSpec((tm * P, c_in), lambda t: (t, 0))]
    args = [jnp.asarray(dense_rows, jnp.bfloat16)]      # halve the HBM read stream
    for (w, b) in folded_params:
        ci, co = int(w.shape[0]), int(w.shape[1])
        args += [jnp.asarray(w, jnp.bfloat16),
                 jnp.asarray(b, jnp.float32).reshape(1, co)]
        in_specs += [pl.BlockSpec((ci, co), lambda t: (0, 0)),
                     pl.BlockSpec((1, co), lambda t: (0, 0))]

    out = pl.pallas_call(
        _make_fused_kernel(n_layers, tm, P),
        out_shape=jax.ShapeDtypeStruct((M_pad, c_out), jnp.float32),
        grid_spec=pltpu.PrefetchScalarGridSpec(
            num_scalar_prefetch=0,
            grid=(num_tiles,),
            in_specs=in_specs,
            out_specs=pl.BlockSpec((tm, c_out), lambda t: (t, 0)),
        ),
        compiler_params=pltpu.CompilerParams(
            dimension_semantics=("parallel",),        # pillar tiles shard on v7x TCs
            vmem_limit_bytes=32 * 1024 * 1024,        # plenty; fits v7x's 64 MiB VMEM
        ),
    )(*args)
    return out[:M]


# ----------------------------------------------------------------------------
# Module-equivalent wrapper
# ----------------------------------------------------------------------------
SparseConvTensorLike = namedtuple(
    "SparseConvTensorLike", ["features", "indices", "spatial_shape", "batch_size"]
)


def init_pillar_max_pooling_params(mlps, key):
    """Deterministic parameters: xavier-normal Linear weights, BN (eval) folded."""
    params = []
    eps = 1e-3
    for k in range(len(mlps) - 1):
        key, k1, k2, k3 = jax.random.split(key, 4)
        fan_in, fan_out = mlps[k], mlps[k + 1]
        std = math.sqrt(2.0 / (fan_in + fan_out))
        w = std * jax.random.normal(k1, (fan_in, fan_out), jnp.float32)  # Linear.weight.T
        gamma = 1.0 + 0.1 * jax.random.normal(k2, (fan_out,), jnp.float32)
        beta = 0.1 * jax.random.normal(k3, (fan_out,), jnp.float32)
        running_mean = jnp.zeros((fan_out,), jnp.float32)
        running_var = jnp.ones((fan_out,), jnp.float32)
        # BatchNorm1d folded as eval-mode affine (running stats).
        scale = gamma / jnp.sqrt(running_var + eps)
        bias = beta - running_mean * scale
        params.append((w, scale, bias))
    return params


def pillar_max_pooling_forward(xyz, xyz_batch_cnt, pt_feature, params,
                               pillar_size, point_cloud_range):
    B = int(np.asarray(xyz_batch_cnt).shape[0])
    bev_width, bev_height = bev_spatial_shape(point_cloud_range, pillar_size)

    pillar_indices, _, gf_sorted, starts = pillar_query_and_group(
        xyz, xyz_batch_cnt, pt_feature, pillar_size, point_cloud_range
    )
    M = pillar_indices.shape[0]
    c_out = int(params[-1][0].shape[1])

    if M == 0:
        return SparseConvTensorLike(
            features=jnp.zeros((0, c_out), jnp.float32),
            indices=jnp.zeros((0, 3), jnp.int32),
            spatial_shape=(bev_height, bev_width),
            batch_size=B,
        )

    c_in = gf_sorted.shape[1]
    c_in_pad = _round_up(c_in, 8)
    max_count = int(np.max(np.diff(starts)))
    P, tm, _, M_pad = choose_tiling(M, max_count)

    dense_rows = densify_pillars(gf_sorted, starts, M, M_pad, P, c_in_pad)
    folded = fold_params(params, c_in_pad)

    pillar_features = fused_mlp_pillar_max(dense_rows, folded, M, M_pad, P, tm)

    return SparseConvTensorLike(
        features=pillar_features,
        indices=jnp.asarray(pillar_indices),
        spatial_shape=(bev_height, bev_width),
        batch_size=B,
    )


# ----------------------------------------------------------------------------
if __name__ == "__main__":
    key = jax.random.PRNGKey(0)

    B = 2
    N_per = 64
    C_pt = 4
    pillar_size = 0.5
    point_cloud_range = [0.0, 0.0, -1.0, 4.0, 4.0, 1.0]   # -> 8 x 8 BEV grid
    mlps = [C_pt + 3, 16, 32]                              # group feats = C + rel-xyz

    k_xy, k_z, k_f, k_p = jax.random.split(key, 4)
    N = B * N_per
    xy = jax.random.uniform(k_xy, (N, 2), minval=0.05, maxval=3.95)
    z = jax.random.uniform(k_z, (N, 1), minval=-0.9, maxval=0.9)
    xyz = jnp.concatenate([xy, z], axis=1).astype(jnp.float32)
    pt_feature = jax.random.normal(k_f, (N, C_pt), jnp.float32)
    xyz_batch_cnt = jnp.array([N_per, N_per], dtype=jnp.int32)

    params = init_pillar_max_pooling_params(mlps, k_p)

    out = pillar_max_pooling_forward(
        xyz, xyz_batch_cnt, pt_feature, params, pillar_size, point_cloud_range
    )
    jax.block_until_ready(out.features)
    jax.block_until_ready(out.indices)

    # ---- lightweight host reference (same bf16 rounding / scale folding) ----
    def _bf16(a):
        return np.asarray(jnp.asarray(np.asarray(a)).astype(jnp.bfloat16)
                          .astype(jnp.float32))

    pil_idx, _, gf_s, starts = pillar_query_and_group(
        xyz, xyz_batch_cnt, pt_feature, pillar_size, point_cloud_range
    )
    M = pil_idx.shape[0]
    c_in = gf_s.shape[1]
    c_in_pad = _round_up(c_in, 8)
    folded_ref = fold_params(params, c_in_pad)
    c_out = folded_ref[-1][0].shape[1]

    ref = np.zeros((M, c_out), np.float32)
    for m in range(M):
        h = np.asarray(gf_s[starts[m]:starts[m + 1]], np.float32)
        h = np.pad(h, ((0, 0), (0, c_in_pad - c_in)))
        for (w, b) in folded_ref:
            h = np.maximum(_bf16(h) @ _bf16(w) + b, 0.0).astype(np.float32)
        ref[m] = h.max(axis=0)

    got = np.asarray(out.features)
    assert got.shape == (M, mlps[-1])
    assert out.features.shape[0] == out.indices.shape[0]
    assert np.array_equal(np.asarray(out.indices), pil_idx)
    np.testing.assert_allclose(got, ref, rtol=1e-2, atol=1e-2)

    print("KERNEL_OK")
</pallas_src>

<mosaic_0001>
module attributes {stable_mosaic.version = 11 : i64} {
  func.func @kernel(%arg0: i32, %arg1: memref<576x8xbf16, #tpu.memory_space<vmem>>, %arg2: memref<8x16xbf16, #tpu.memory_space<vmem>>, %arg3: memref<1x16xf32, #tpu.memory_space<vmem>>, %arg4: memref<16x32xbf16, #tpu.memory_space<vmem>>, %arg5: memref<1x32xf32, #tpu.memory_space<vmem>>, %arg6: memref<72x32xf32, #tpu.memory_space<vmem>>) attributes {dimension_semantics = [#tpu.dimension_semantics<parallel>], iteration_bounds = array<i64: 1>, scalar_prefetch = 0 : i64, scratch_operands = 0 : i64, tpu.core_type = #tpu.core_type<tc>, window_params = [{transform_indices = @transform_0, window_bounds = array<i64: 576, 8>}, {pipeline_mode = #tpu.pipeline_mode<synchronous>, transform_indices = @transform_1, window_bounds = array<i64: 8, 16>}, {pipeline_mode = #tpu.pipeline_mode<synchronous>, transform_indices = @transform_2, window_bounds = array<i64: 1, 16>}, {pipeline_mode = #tpu.pipeline_mode<synchronous>, transform_indices = @transform_3, window_bounds = array<i64: 16, 32>}, {pipeline_mode = #tpu.pipeline_mode<synchronous>, transform_indices = @transform_4, window_bounds = array<i64: 1, 32>}, {transform_indices = @transform_5, window_bounds = array<i64: 72, 32>}]} {
    %c0 = arith.constant 0 : index
    %c0_0 = arith.constant 0 : index
    %0 = vector.load %arg1[%c0, %c0_0] : memref<576x8xbf16, #tpu.memory_space<vmem>>, vector<576x8xbf16>
    %c0_1 = arith.constant 0 : index
    %c0_2 = arith.constant 0 : index
    %1 = vector.load %arg2[%c0_1, %c0_2] : memref<8x16xbf16, #tpu.memory_space<vmem>>, vector<8x16xbf16>
    %cst = arith.constant dense<0.000000e+00> : vector<576x16xf32>
    %2 = tpu.matmul %0, %1, %cst {dimension_numbers = #tpu.dot_dimension_numbers<[1], [0], [0], [1], [0, 0, 1, 1], [], []>} : vector<576x8xbf16>, vector<8x16xbf16>, vector<576x16xf32> -> vector<576x16xf32>
    %c0_3 = arith.constant 0 : index
    %c0_4 = arith.constant 0 : index
    %3 = vector.load %arg3[%c0_3, %c0_4] : memref<1x16xf32, #tpu.memory_space<vmem>>, vector<1x16xf32>
    %4 = vector.broadcast %3 : vector<1x16xf32> to vector<576x16xf32>
    %5 = arith.addf %2, %4 : vector<576x16xf32>
    %cst_5 = arith.constant 0.000000e+00 : f32
    %6 = vector.broadcast %cst_5 : f32 to vector<576x16xf32>
    %7 = arith.maximumf %5, %6 : vector<576x16xf32>
    %8 = arith.truncf %7 : vector<576x16xf32> to vector<576x16xbf16>
    %c0_6 = arith.constant 0 : index
    %c0_7 = arith.constant 0 : index
    %9 = vector.load %arg4[%c0_6, %c0_7] : memref<16x32xbf16, #tpu.memory_space<vmem>>, vector<16x32xbf16>
    %cst_8 = arith.constant dense<0.000000e+00> : vector<576x32xf32>
    %10 = tpu.matmul %8, %9, %cst_8 {dimension_numbers = #tpu.dot_dimension_numbers<[1], [0], [0], [1], [0, 0, 1, 1], [], []>} : vector<576x16xbf16>, vector<16x32xbf16>, vector<576x32xf32> -> vector<576x32xf32>
    %c0_9 = arith.constant 0 : index
    %c0_10 = arith.constant 0 : index
    %11 = vector.load %arg5[%c0_9, %c0_10] : memref<1x32xf32, #tpu.memory_space<vmem>>, vector<1x32xf32>
    %12 = vector.broadcast %11 : vector<1x32xf32> to vector<576x32xf32>
    %13 = arith.addf %10, %12 : vector<576x32xf32>
    %cst_11 = arith.constant 0.000000e+00 : f32
    %14 = vector.broadcast %cst_11 : f32 to vector<576x32xf32>
    %15 = arith.maximumf %13, %14 : vector<576x32xf32>
    %16 = vector.shape_cast %15 : vector<576x32xf32> to vector<72x8x32xf32>
    %cst_12 = arith.constant dense<0xFF800000> : vector<72x32xf32>
    %17 = vector.multi_reduction <maximumf>, %16, %cst_12 [1] : vector<72x8x32xf32> to vector<72x32xf32>
    %c0_13 = arith.constant 0 : index
    %c0_14 = arith.constant 0 : index
    %18 = vector.load %arg6[%c0_13, %c0_14] : memref<72x32xf32, #tpu.memory_space<vmem>>, vector<72x32xf32>
    tpu.vector_store %arg6[%c0_13, %c0_14], %17 {strides = array<i32>} : memref<72x32xf32, #tpu.memory_space<vmem>>, vector<72x32xf32>,
    return
  }
  func.func @transform_0(%arg0: i32) -> (i32, i32) {
    %c0_i32 = arith.constant 0 : i32
    %c0_i32_0 = arith.constant 0 : i32
    return %arg0, %c0_i32 : i32, i32
  }
  func.func @transform_1(%arg0: i32) -> (i32, i32) {
    %c0_i32 = arith.constant 0 : i32
    %c0_i32_0 = arith.constant 0 : i32
    %c0_i32_1 = arith.constant 0 : i32
    return %c0_i32, %c0_i32_0 : i32, i32
  }
  func.func @transform_2(%arg0: i32) -> (i32, i32) {
    %c0_i32 = arith.constant 0 : i32
    %c0_i32_0 = arith.constant 0 : i32
    %c0_i32_1 = arith.constant 0 : i32
    return %c0_i32, %c0_i32_0 : i32, i32
  }
  func.func @transform_3(%arg0: i32) -> (i32, i32) {
    %c0_i32 = arith.constant 0 : i32
    %c0_i32_0 = arith.constant 0 : i32
    %c0_i32_1 = arith.constant 0 : i32
    return %c0_i32, %c0_i32_0 : i32, i32
  }
  func.func @transform_4(%arg0: i32) -> (i32, i32) {
    %c0_i32 = arith.constant 0 : i32
    %c0_i32_0 = arith.constant 0 : i32
    %c0_i32_1 = arith.constant 0 : i32
    return %c0_i32, %c0_i32_0 : i32, i32
  }
  func.func @transform_5(%arg0: i32) -> (i32, i32) {
    %c0_i32 = arith.constant 0 : i32
    %c0_i32_0 = arith.constant 0 : i32
    return %arg0, %c0_i32 : i32, i32
  }
}

</mosaic_0001>

<llo_original>
// kernel: tpu_custom_call.1
$region0: #{tpu_custom_call.1}
  #allocation0 [shape = 'u32[]', space=smem, size = 0x4, offset = 0x4, fixed_abs, tag = 'smem constant byte address 0x4 - core index']
  #allocation1 [shape = 'u32[144,128]{1,0:T(1,128)}', space=vmem, size = 0x12000, scoped, tag = 'internal scratch']
  %s0 = inlined_call_operand.vmem [shape: bf16[576,8], index: 0, kind: input, shape index: {}]
  %s1 = inlined_call_operand.vmem [shape: bf16[8,16], index: 1, kind: input, shape index: {}]
  %s2 = inlined_call_operand.vmem [shape: f32[1,16], index: 2, kind: input, shape index: {}]
  %s3 = inlined_call_operand.vmem [shape: bf16[16,32], index: 3, kind: input, shape index: {}]
  %s4 = inlined_call_operand.vmem [shape: f32[1,32], index: 4, kind: input, shape index: {}]
  %s5 = inlined_call_operand.vmem [shape: f32[72,32], index: 5, kind: output, shape index: {}]
  %s6 = sld [smem:[#allocation0]]
  $region30: #{tpu_custom_call.1} parent=0
    _
  %s8 = ssub.s32 1, %s6
  %s9 = scalar_select 0, %s8, %s6
  // Predicated region
  $region2: #{tpu_custom_call.1} parent=0 // pred_check
    _
  $region3: #{tpu_custom_call.1} parent=0 // pred_check_branch
    %11 = sbr.rel (0) target = $region5
  $region4: #{tpu_custom_call.1} parent=0 // pred_region
    _
  $region5: #{tpu_custom_call.1} parent=0 // pred_fallthru
    _
  // Predicated region
  $region6: #{tpu_custom_call.1} parent=0 // pred_check
    _
  $region7: #{tpu_custom_call.1} parent=0 // pred_check_branch
    %13 = sbr.rel (0) target = $region9
  $region8: #{tpu_custom_call.1} parent=0 // pred_region
    _
  $region9: #{tpu_custom_call.1} parent=0 // pred_fallthru
    _
  // Predicated region
  $region10: #{tpu_custom_call.1} parent=0 // pred_check
    _
  $region11: #{tpu_custom_call.1} parent=0 // pred_check_branch
    %15 = sbr.rel (0) target = $region13
  $region12: #{tpu_custom_call.1} parent=0 // pred_region
    _
  $region13: #{tpu_custom_call.1} parent=0 // pred_fallthru
    _
  // Predicated region
  $region14: #{tpu_custom_call.1} parent=0 // pred_check
    _
  $region15: #{tpu_custom_call.1} parent=0 // pred_check_branch
    %17 = sbr.rel (0) target = $region17
  $region16: #{tpu_custom_call.1} parent=0 // pred_region
    _
  $region17: #{tpu_custom_call.1} parent=0 // pred_fallthru
    _
  // Predicated region
  $region18: #{tpu_custom_call.1} parent=0 // pred_check
    _
  $region19: #{tpu_custom_call.1} parent=0 // pred_check_branch
    %19 = sbr.rel (0) target = $region21
  $region20: #{tpu_custom_call.1} parent=0 // pred_region
    _
  $region21: #{tpu_custom_call.1} parent=0 // pred_fallthru
    _
  %v21 = vld [vmem:[%s0] sm:$0xf]
  %v22 = vld [vmem:[%s0 + $0x4] sm:$0xf]
  %v23 = vld [vmem:[%s0 + $0x8] sm:$0xf]
  %v24 = vld [vmem:[%s0 + $0xc] sm:$0xf]
  %v25 = vld [vmem:[%s0 + $0x10] sm:$0xf]
  %v26 = vld [vmem:[%s0 + $0x14] sm:$0xf]
  %v27 = vld [vmem:[%s0 + $0x18] sm:$0xf]
  %v28 = vld [vmem:[%s0 + $0x1c] sm:$0xf]
  %v29 = vld [vmem:[%s0 + $0x20] sm:$0xf]
  %v30 = vld [vmem:[%s0 + $0x24] sm:$0xf]
  %v31 = vld [vmem:[%s0 + $0x28] sm:$0xf]
  %v32 = vld [vmem:[%s0 + $0x2c] sm:$0xf]
  %v33 = vld [vmem:[%s0 + $0x30] sm:$0xf]
  %v34 = vld [vmem:[%s0 + $0x34] sm:$0xf]
  %v35 = vld [vmem:[%s0 + $0x38] sm:$0xf]
  %v36 = vld [vmem:[%s0 + $0x3c] sm:$0xf]
  %v37 = vld [vmem:[%s0 + $0x40] sm:$0xf]
  %v38 = vld [vmem:[%s0 + $0x44] sm:$0xf]
  %v39 = vld [vmem:[%s0 + $0x48] sm:$0xf]
  %v40 = vld [vmem:[%s0 + $0x4c] sm:$0xf]
  %v41 = vld [vmem:[%s0 + $0x50] sm:$0xf]
  %v42 = vld [vmem:[%s0 + $0x54] sm:$0xf]
  %v43 = vld [vmem:[%s0 + $0x58] sm:$0xf]
  %v44 = vld [vmem:[%s0 + $0x5c] sm:$0xf]
  %v45 = vld [vmem:[%s0 + $0x60] sm:$0xf]
  %v46 = vld [vmem:[%s0 + $0x64] sm:$0xf]
  %v47 = vld [vmem:[%s0 + $0x68] sm:$0xf]
  %v48 = vld [vmem:[%s0 + $0x6c] sm:$0xf]
  %v49 = vld [vmem:[%s0 + $0x70] sm:$0xf]
  %v50 = vld [vmem:[%s0 + $0x74] sm:$0xf]
  %v51 = vld [vmem:[%s0 + $0x78] sm:$0xf]
  %v52 = vld [vmem:[%s0 + $0x7c] sm:$0xf]
  %v53 = vld [vmem:[%s0 + $0x80] sm:$0xf]
  %v54 = vld [vmem:[%s0 + $0x84] sm:$0xf]
  %v55 = vld [vmem:[%s0 + $0x88] sm:$0xf]
  %v56 = vld [vmem:[%s0 + $0x8c] sm:$0xf]
  %v57 = vld [vmem:[%s0 + $0x90] sm:$0xf]
  %v58 = vld [vmem:[%s0 + $0x94] sm:$0xf]
  %v59 = vld [vmem:[%s0 + $0x98] sm:$0xf]
  %v60 = vld [vmem:[%s0 + $0x9c] sm:$0xf]
  %v61 = vld [vmem:[%s0 + $0xa0] sm:$0xf]
  %v62 = vld [vmem:[%s0 + $0xa4] sm:$0xf]
  %v63 = vld [vmem:[%s0 + $0xa8] sm:$0xf]
  %v64 = vld [vmem:[%s0 + $0xac] sm:$0xf]
  %v65 = vld [vmem:[%s0 + $0xb0] sm:$0xf]
  %v66 = vld [vmem:[%s0 + $0xb4] sm:$0xf]
  %v67 = vld [vmem:[%s0 + $0xb8] sm:$0xf]
  %v68 = vld [vmem:[%s0 + $0xbc] sm:$0xf]
  %v69 = vld [vmem:[%s0 + $0xc0] sm:$0xf]
  %v70 = vld [vmem:[%s0 + $0xc4] sm:$0xf]
  %v71 = vld [vmem:[%s0 + $0xc8] sm:$0xf]
  %v72 = vld [vmem:[%s0 + $0xcc] sm:$0xf]
  %v73 = vld [vmem:[%s0 + $0xd0] sm:$0xf]
  %v74 = vld [vmem:[%s0 + $0xd4] sm:$0xf]
  %v75 = vld [vmem:[%s0 + $0xd8] sm:$0xf]
  %v76 = vld [vmem:[%s0 + $0xdc] sm:$0xf]
  %v77 = vld [vmem:[%s0 + $0xe0] sm:$0xf]
  %v78 = vld [vmem:[%s0 + $0xe4] sm:$0xf]
  %v79 = vld [vmem:[%s0 + $0xe8] sm:$0xf]
  %v80 = vld [vmem:[%s0 + $0xec] sm:$0xf]
  %v81 = vld [vmem:[%s0 + $0xf0] sm:$0xf]
  %v82 = vld [vmem:[%s0 + $0xf4] sm:$0xf]
  %v83 = vld [vmem:[%s0 + $0xf8] sm:$0xf]
  %v84 = vld [vmem:[%s0 + $0xfc] sm:$0xf]
  %v85 = vld [vmem:[%s0 + $0x100] sm:$0xf]
  %v86 = vld [vmem:[%s0 + $0x104] sm:$0xf]
  %v87 = vld [vmem:[%s0 + $0x108] sm:$0xf]
  %v88 = vld [vmem:[%s0 + $0x10c] sm:$0xf]
  %v89 = vld [vmem:[%s0 + $0x110] sm:$0xf]
  %v90 = vld [vmem:[%s0 + $0x114] sm:$0xf]
  %v91 = vld [vmem:[%s0 + $0x118] sm:$0xf]
  %v92 = vld [vmem:[%s0 + $0x11c] sm:$0xf]
  %v93 = vld [vmem:[%s1] sm:$0xf]
  %v94 = vld [vmem:[%s2] sm:$0x1]
  %v96 = vlaneseq
  %v97 = vshrl.u32 %v96, 7
  %v98 = vsub.s32 0, %v97
  %v99 = vrot.slane %v94, %v98
  %v173 = vunpack.c.l.b16 %v21
  %v174 = vunpack.c.l.b16 %v22
  %v175 = vunpack.c.l.b16 %v23
  %v176 = vunpack.c.l.b16 %v24
  %v177 = vunpack.c.l.b16 %v25
  %v178 = vunpack.c.l.b16 %v26
  %v179 = vunpack.c.l.b16 %v27
  %v180 = vunpack.c.l.b16 %v28
  %v181 = vunpack.c.l.b16 %v29
  %v182 = vunpack.c.l.b16 %v30
  %v183 = vunpack.c.l.b16 %v31
  %v184 = vunpack.c.l.b16 %v32
  %v185 = vunpack.c.l.b16 %v33
  %v186 = vunpack.c.l.b16 %v34
  %v187 = vunpack.c.l.b16 %v35
  %v188 = vunpack.c.l.b16 %v36
  %v189 = vunpack.c.l.b16 %v37
  %v190 = vunpack.c.l.b16 %v38
  %v191 = vunpack.c.l.b16 %v39
  %v192 = vunpack.c.l.b16 %v40
  %v193 = vunpack.c.l.b16 %v41
  %v194 = vunpack.c.l.b16 %v42
  %v195 = vunpack.c.l.b16 %v43
  %v196 = vunpack.c.l.b16 %v44
  %v197 = vunpack.c.l.b16 %v45
  %v198 = vunpack.c.l.b16 %v46
  %v199 = vunpack.c.l.b16 %v47
  %v200 = vunpack.c.l.b16 %v48
  %v201 = vunpack.c.l.b16 %v49
  %v202 = vunpack.c.l.b16 %v50
  %v203 = vunpack.c.l.b16 %v51
  %v204 = vunpack.c.l.b16 %v52
  %v205 = vunpack.c.l.b16 %v53
  %v206 = vunpack.c.l.b16 %v54
  %v207 = vunpack.c.l.b16 %v55
  %v208 = vunpack.c.l.b16 %v56
  %v209 = vunpack.c.l.b16 %v57
  %v210 = vunpack.c.l.b16 %v58
  %v211 = vunpack.c.l.b16 %v59
  %v212 = vunpack.c.l.b16 %v60
  %v213 = vunpack.c.l.b16 %v61
  %v214 = vunpack.c.l.b16 %v62
  %v215 = vunpack.c.l.b16 %v63
  %v216 = vunpack.c.l.b16 %v64
  %v217 = vunpack.c.l.b16 %v65
  %v218 = vunpack.c.l.b16 %v66
  %v219 = vunpack.c.l.b16 %v67
  %v220 = vunpack.c.l.b16 %v68
  %v221 = vunpack.c.l.b16 %v69
  %v222 = vunpack.c.l.b16 %v70
  %v223 = vunpack.c.l.b16 %v71
  %v224 = vunpack.c.l.b16 %v72
  %v225 = vunpack.c.l.b16 %v73
  %v226 = vunpack.c.l.b16 %v74
  %v227 = vunpack.c.l.b16 %v75
  %v228 = vunpack.c.l.b16 %v76
  %v229 = vunpack.c.l.b16 %v77
  %v230 = vunpack.c.l.b16 %v78
  %v231 = vunpack.c.l.b16 %v79
  %v232 = vunpack.c.l.b16 %v80
  %v233 = vunpack.c.l.b16 %v81
  %v234 = vunpack.c.l.b16 %v82
  %v235 = vunpack.c.l.b16 %v83
  %v236 = vunpack.c.l.b16 %v84
  %v237 = vunpack.c.l.b16 %v85
  %v238 = vunpack.c.l.b16 %v86
  %v239 = vunpack.c.l.b16 %v87
  %v240 = vunpack.c.l.b16 %v88
  %v241 = vunpack.c.l.b16 %v89
  %v242 = vunpack.c.l.b16 %v90
  %v243 = vunpack.c.l.b16 %v91
  %v244 = vunpack.c.l.b16 %v92
  %v245 = vpack.c.b16 %v174, %v173
  %v246 = vpack.c.b16 %v176, %v175
  %v247 = vpack.c.b16 %v178, %v177
  %v248 = vpack.c.b16 %v180, %v179
  %v249 = vpack.c.b16 %v182, %v181
  %v250 = vpack.c.b16 %v184, %v183
  %v251 = vpack.c.b16 %v186, %v185
  %v252 = vpack.c.b16 %v188, %v187
  %v253 = vpack.c.b16 %v190, %v189
  %v254 = vpack.c.b16 %v192, %v191
  %v255 = vpack.c.b16 %v194, %v193
  %v256 = vpack.c.b16 %v196, %v195
  %v257 = vpack.c.b16 %v198, %v197
  %v258 = vpack.c.b16 %v200, %v199
  %v259 = vpack.c.b16 %v202, %v201
  %v260 = vpack.c.b16 %v204, %v203
  %v261 = vpack.c.b16 %v206, %v205
  %v262 = vpack.c.b16 %v208, %v207
  %v263 = vpack.c.b16 %v210, %v209
  %v264 = vpack.c.b16 %v212, %v211
  %v265 = vpack.c.b16 %v214, %v213
  %v266 = vpack.c.b16 %v216, %v215
  %v267 = vpack.c.b16 %v218, %v217
  %v268 = vpack.c.b16 %v220, %v219
  %v269 = vpack.c.b16 %v222, %v221
  %v270 = vpack.c.b16 %v224, %v223
  %v271 = vpack.c.b16 %v226, %v225
  %v272 = vpack.c.b16 %v228, %v227
  %v273 = vpack.c.b16 %v230, %v229
  %v274 = vpack.c.b16 %v232, %v231
  %v275 = vpack.c.b16 %v234, %v233
  %v276 = vpack.c.b16 %v236, %v235
  %v277 = vpack.c.b16 %v238, %v237
  %v278 = vpack.c.b16 %v240, %v239
  %v279 = vpack.c.b16 %v242, %v241
  %v280 = vpack.c.b16 %v244, %v243
  %vm281 = vcmask 64512
  %v283 = vsel %vm281, %v245, 0
  %v286 = vsel %vm281, %v246, 0
  %v289 = vsel %vm281, %v247, 0
  %v292 = vsel %vm281, %v248, 0
  %v295 = vsel %vm281, %v249, 0
  %v298 = vsel %vm281, %v250, 0
  %v301 = vsel %vm281, %v251, 0
  %v304 = vsel %vm281, %v252, 0
  %v307 = vsel %vm281, %v253, 0
  %v310 = vsel %vm281, %v254, 0
  %v313 = vsel %vm281, %v255, 0
  %v316 = vsel %vm281, %v256, 0
  %v319 = vsel %vm281, %v257, 0
  %v322 = vsel %vm281, %v258, 0
  %v325 = vsel %vm281, %v259, 0
  %v328 = vsel %vm281, %v260, 0
  %v331 = vsel %vm281, %v261, 0
  %v334 = vsel %vm281, %v262, 0
  %v337 = vsel %vm281, %v263, 0
  %v340 = vsel %vm281, %v264, 0
  %v343 = vsel %vm281, %v265, 0
  %v346 = vsel %vm281, %v266, 0
  %v349 = vsel %vm281, %v267, 0
  %v352 = vsel %vm281, %v268, 0
  %v355 = vsel %vm281, %v269, 0
  %v358 = vsel %vm281, %v270, 0
  %v361 = vsel %vm281, %v271, 0
  %v364 = vsel %vm281, %v272, 0
  %v367 = vsel %vm281, %v273, 0
  %v370 = vsel %vm281, %v274, 0
  %v373 = vsel %vm281, %v275, 0
  %v376 = vsel %vm281, %v276, 0
  %v379 = vsel %vm281, %v277, 0
  %v382 = vsel %vm281, %v278, 0
  %v385 = vsel %vm281, %v279, 0
  %v388 = vsel %vm281, %v280, 0
  %vm390 = vcmask 1043456
  %v392 = vsel %vm390, %v93, 0
  %394 = vmatprep.subr.bf16.mxu0 0
  %395 = vmatpush1.bf16.msra.mxu0 0
  %396 = vmatprep.subr.bf16.mxu0 0
  %397 = vmatpush1.bf16.msra.mxu0 0
  %398 = vmatprep.subr.bf16.mxu0 0
  %399 = vmatpush1.bf16.msra.mxu0 0
  %400 = vmatprep.subr.bf16.mxu0 0
  %401 = vmatpush1.bf16.msra.mxu0 0
  %402 = vmatprep.subr.bf16.mxu0 0
  %403 = vmatpush1.bf16.msra.mxu0 0
  %404 = vmatprep.subr.bf16.mxu0 0
  %405 = vmatpush1.bf16.msra.mxu0 0
  %406 = vmatprep.subr.bf16.mxu0 0
  %407 = vmatpush1.bf16.msra.mxu0 0
  %408 = vmatprep.subr.bf16.mxu0 0
  %409 = vmatpush1.bf16.msra.mxu0 %v392
  %410 = vmatprep.subr.bf16.mxu0 0
  %411 = vmatpush2.bf16.msra.mxu0 0
  %412 = vmatprep.subr.bf16.mxu0 0
  %413 = vmatpush2.bf16.msra.mxu0 0
  %414 = vmatprep.subr.bf16.mxu0 0
  %415 = vmatpush2.bf16.msra.mxu0 0
  %416 = vmatprep.subr.bf16.mxu0 0
  %417 = vmatpush2.bf16.msra.mxu0 0
  %418 = vmatprep.subr.bf16.mxu0 0
  %419 = vmatpush2.bf16.msra.mxu0 0
  %420 = vmatprep.subr.bf16.mxu0 0
  %421 = vmatpush2.bf16.msra.mxu0 0
  %422 = vmatprep.subr.bf16.mxu0 0
  %423 = vmatpush2.bf16.msra.mxu0 0
  %424 = vmatprep.subr.bf16.mxu0 0
  %425 = vmatpush2.bf16.msra.mxu0 0
  %426 = vmatprep.mubr.bf16.mxu0 0
  %427 = vmatmul.mubr.bf16.gmra.mxu0 %v283
  %v428 = vpop.f32.mrf.mxu0
  %v429 = vadd.f32 %v99, %v428
  %v430 = vpop.f32.mrf.mxu0
  %v431 = vpop.f32.mrf.mxu0
  %v432 = vadd.f32 %v99, %v431
  %v433 = vpop.f32.mrf.mxu0
  %434 = vmatprep.mubr.bf16.mxu0 0
  %435 = vmatmul.mubr.bf16.gmra.mxu0 %v286
  %v436 = vpop.f32.mrf.mxu0
  %v437 = vadd.f32 %v99, %v436
  %v438 = vpop.f32.mrf.mxu0
  %v439 = vpop.f32.mrf.mxu0
  %v440 = vadd.f32 %v99, %v439
  %v441 = vpop.f32.mrf.mxu0
  %442 = vmatprep.mubr.bf16.mxu0 0
  %443 = vmatmul.mubr.bf16.gmra.mxu0 %v289
  %v444 = vpop.f32.mrf.mxu0
  %v445 = vadd.f32 %v99, %v444
  %v446 = vpop.f32.mrf.mxu0
  %v447 = vpop.f32.mrf.mxu0
  %v448 = vadd.f32 %v99, %v447
  %v449 = vpop.f32.mrf.mxu0
  %450 = vmatprep.mubr.bf16.mxu0 0
  %451 = vmatmul.mubr.bf16.gmra.mxu0 %v292
  %v452 = vpop.f32.mrf.mxu0
  %v453 = vadd.f32 %v99, %v452
  %v454 = vpop.f32.mrf.mxu0
  %v455 = vpop.f32.mrf.mxu0
  %v456 = vadd.f32 %v99, %v455
  %v457 = vpop.f32.mrf.mxu0
  %458 = vmatprep.mubr.bf16.mxu0 0
  %459 = vmatmul.mubr.bf16.gmra.mxu0 %v295
  %v460 = vpop.f32.mrf.mxu0
  %v461 = vadd.f32 %v99, %v460
  %v462 = vpop.f32.mrf.mxu0
  %v463 = vpop.f32.mrf.mxu0
  %v464 = vadd.f32 %v99, %v463
  %v465 = vpop.f32.mrf.mxu0
  %466 = vmatprep.mubr.bf16.mxu0 0
  %467 = vmatmul.mubr.bf16.gmra.mxu0 %v298
  %v468 = vpop.f32.mrf.mxu0
  %v469 = vadd.f32 %v99, %v468
  %v470 = vpop.f32.mrf.mxu0
  %v471 = vpop.f32.mrf.mxu0
  %v472 = vadd.f32 %v99, %v471
  %v473 = vpop.f32.mrf.mxu0
  %474 = vmatprep.mubr.bf16.mxu0 0
  %475 = vmatmul.mubr.bf16.gmra.mxu0 %v301
  %v476 = vpop.f32.mrf.mxu0
  %v477 = vadd.f32 %v99, %v476
  %v478 = vpop.f32.mrf.mxu0
  %v479 = vpop.f32.mrf.mxu0
  %v480 = vadd.f32 %v99, %v479
  %v481 = vpop.f32.mrf.mxu0
  %482 = vmatprep.mubr.bf16.mxu0 0
  %483 = vmatmul.mubr.bf16.gmra.mxu0 %v304
  %v484 = vpop.f32.mrf.mxu0
  %v485 = vadd.f32 %v99, %v484
  %v486 = vpop.f32.mrf.mxu0
  %v487 = vpop.f32.mrf.mxu0
  %v488 = vadd.f32 %v99, %v487
  %v489 = vpop.f32.mrf.mxu0
  %490 = vmatprep.mubr.bf16.mxu0 0
  %491 = vmatmul.mubr.bf16.gmra.mxu0 %v307
  %v492 = vpop.f32.mrf.mxu0
  %v493 = vadd.f32 %v99, %v492
  %v494 = vpop.f32.mrf.mxu0
  %v495 = vpop.f32.mrf.mxu0
  %v496 = vadd.f32 %v99, %v495
  %v497 = vpop.f32.mrf.mxu0
  %498 = vmatprep.mubr.bf16.mxu0 0
  %499 = vmatmul.mubr.bf16.gmra.mxu0 %v310
  %v500 = vpop.f32.mrf.mxu0
  %v501 = vadd.f32 %v99, %v500
  %v502 = vpop.f32.mrf.mxu0
  %v503 = vpop.f32.mrf.mxu0
  %v504 = vadd.f32 %v99, %v503
  %v505 = vpop.f32.mrf.mxu0
  %506 = vmatprep.mubr.bf16.mxu0 0
  %507 = vmatmul.mubr.bf16.gmra.mxu0 %v313
  %v508 = vpop.f32.mrf.mxu0
  %v509 = vadd.f32 %v99, %v508
  %v510 = vpop.f32.mrf.mxu0
  %v511 = vpop.f32.mrf.mxu0
  %v512 = vadd.f32 %v99, %v511
  %v513 = vpop.f32.mrf.mxu0
  %514 = vmatprep.mubr.bf16.mxu0 0
  %515 = vmatmul.mubr.bf16.gmra.mxu0 %v316
  %v516 = vpop.f32.mrf.mxu0
  %v517 = vadd.f32 %v99, %v516
  %v518 = vpop.f32.mrf.mxu0
  %v519 = vpop.f32.mrf.mxu0
  %v520 = vadd.f32 %v99, %v519
  %v521 = vpop.f32.mrf.mxu0
  %522 = vmatprep.mubr.bf16.mxu0 0
  %523 = vmatmul.mubr.bf16.gmra.mxu0 %v319
  %v524 = vpop.f32.mrf.mxu0
  %v525 = vadd.f32 %v99, %v524
  %v526 = vpop.f32.mrf.mxu0
  %v527 = vpop.f32.mrf.mxu0
  %v528 = vadd.f32 %v99, %v527
  %v529 = vpop.f32.mrf.mxu0
  %530 = vmatprep.mubr.bf16.mxu0 0
  %531 = vmatmul.mubr.bf16.gmra.mxu0 %v322
  %v532 = vpop.f32.mrf.mxu0
  %v533 = vadd.f32 %v99, %v532
  %v534 = vpop.f32.mrf.mxu0
  %v535 = vpop.f32.mrf.mxu0
  %v536 = vadd.f32 %v99, %v535
  %v537 = vpop.f32.mrf.mxu0
  %538 = vmatprep.mubr.bf16.mxu0 0
  %539 = vmatmul.mubr.bf16.gmra.mxu0 %v325
  %v540 = vpop.f32.mrf.mxu0
  %v541 = vadd.f32 %v99, %v540
  %v542 = vpop.f32.mrf.mxu0
  %v543 = vpop.f32.mrf.mxu0
  %v544 = vadd.f32 %v99, %v543
  %v545 = vpop.f32.mrf.mxu0
  %546 = vmatprep.mubr.bf16.mxu0 0
  %547 = vmatmul.mubr.bf16.gmra.mxu0 %v328
  %v548 = vpop.f32.mrf.mxu0
  %v549 = vadd.f32 %v99, %v548
  %v550 = vpop.f32.mrf.mxu0
  %v551 = vpop.f32.mrf.mxu0
  %v552 = vadd.f32 %v99, %v551
  %v553 = vpop.f32.mrf.mxu0
  %554 = vmatprep.mubr.bf16.mxu0 0
  %555 = vmatmul.mubr.bf16.gmra.mxu0 %v331
  %v556 = vpop.f32.mrf.mxu0
  %v557 = vadd.f32 %v99, %v556
  %v558 = vpop.f32.mrf.mxu0
  %v559 = vpop.f32.mrf.mxu0
  %v560 = vadd.f32 %v99, %v559
  %v561 = vpop.f32.mrf.mxu0
  %562 = vmatprep.mubr.bf16.mxu0 0
  %563 = vmatmul.mubr.bf16.gmra.mxu0 %v334
  %v564 = vpop.f32.mrf.mxu0
  %v565 = vadd.f32 %v99, %v564
  %v566 = vpop.f32.mrf.mxu0
  %v567 = vpop.f32.mrf.mxu0
  %v568 = vadd.f32 %v99, %v567
  %v569 = vpop.f32.mrf.mxu0
  %570 = vmatprep.mubr.bf16.mxu0 0
  %571 = vmatmul.mubr.bf16.gmra.mxu0 %v337
  %v572 = vpop.f32.mrf.mxu0
  %v573 = vadd.f32 %v99, %v572
  %v574 = vpop.f32.mrf.mxu0
  %v575 = vpop.f32.mrf.mxu0
  %v576 = vadd.f32 %v99, %v575
  %v577 = vpop.f32.mrf.mxu0
  %578 = vmatprep.mubr.bf16.mxu0 0
  %579 = vmatmul.mubr.bf16.gmra.mxu0 %v340
  %v580 = vpop.f32.mrf.mxu0
  %v581 = vadd.f32 %v99, %v580
  %v582 = vpop.f32.mrf.mxu0
  %v583 = vpop.f32.mrf.mxu0
  %v584 = vadd.f32 %v99, %v583
  %v585 = vpop.f32.mrf.mxu0
  %586 = vmatprep.mubr.bf16.mxu0 0
  %587 = vmatmul.mubr.bf16.gmra.mxu0 %v343
  %v588 = vpop.f32.mrf.mxu0
  %v589 = vadd.f32 %v99, %v588
  %v590 = vpop.f32.mrf.mxu0
  %v591 = vpop.f32.mrf.mxu0
  %v592 = vadd.f32 %v99, %v591
  %v593 = vpop.f32.mrf.mxu0
  %594 = vmatprep.mubr.bf16.mxu0 0
  %595 = vmatmul.mubr.bf16.gmra.mxu0 %v346
  %v596 = vpop.f32.mrf.mxu0
  %v597 = vadd.f32 %v99, %v596
  %v598 = vpop.f32.mrf.mxu0
  %v599 = vpop.f32.mrf.mxu0
  %v600 = vadd.f32 %v99, %v599
  %v601 = vpop.f32.mrf.mxu0
  %602 = vmatprep.mubr.bf16.mxu0 0
  %603 = vmatmul.mubr.bf16.gmra.mxu0 %v349
  %v604 = vpop.f32.mrf.mxu0
  %v605 = vadd.f32 %v99, %v604
  %v606 = vpop.f32.mrf.mxu0
  %v607 = vpop.f32.mrf.mxu0
  %v608 = vadd.f32 %v99, %v607
  %v609 = vpop.f32.mrf.mxu0
  %610 = vmatprep.mubr.bf16.mxu0 0
  %611 = vmatmul.mubr.bf16.gmra.mxu0 %v352
  %v612 = vpop.f32.mrf.mxu0
  %v613 = vadd.f32 %v99, %v612
  %v614 = vpop.f32.mrf.mxu0
  %v615 = vpop.f32.mrf.mxu0
  %v616 = vadd.f32 %v99, %v615
  %v617 = vpop.f32.mrf.mxu0
  %618 = vmatprep.mubr.bf16.mxu0 0
  %619 = vmatmul.mubr.bf16.gmra.mxu0 %v355
  %v620 = vpop.f32.mrf.mxu0
  %v621 = vadd.f32 %v99, %v620
  %v622 = vpop.f32.mrf.mxu0
  %v623 = vpop.f32.mrf.mxu0
  %v624 = vadd.f32 %v99, %v623
  %v625 = vpop.f32.mrf.mxu0
  %626 = vmatprep.mubr.bf16.mxu0 0
  %627 = vmatmul.mubr.bf16.gmra.mxu0 %v358
  %v628 = vpop.f32.mrf.mxu0
  %v629 = vadd.f32 %v99, %v628
  %v630 = vpop.f32.mrf.mxu0
  %v631 = vpop.f32.mrf.mxu0
  %v632 = vadd.f32 %v99, %v631
  %v633 = vpop.f32.mrf.mxu0
  %634 = vmatprep.mubr.bf16.mxu0 0
  %635 = vmatmul.mubr.bf16.gmra.mxu0 %v361
  %v636 = vpop.f32.mrf.mxu0
  %v637 = vadd.f32 %v99, %v636
  %v638 = vpop.f32.mrf.mxu0
  %v639 = vpop.f32.mrf.mxu0
  %v640 = vadd.f32 %v99, %v639
  %v641 = vpop.f32.mrf.mxu0
  %642 = vmatprep.mubr.bf16.mxu0 0
  %643 = vmatmul.mubr.bf16.gmra.mxu0 %v364
  %v644 = vpop.f32.mrf.mxu0
  %v645 = vadd.f32 %v99, %v644
  %v646 = vpop.f32.mrf.mxu0
  %v647 = vpop.f32.mrf.mxu0
  %v648 = vadd.f32 %v99, %v647
  %v649 = vpop.f32.mrf.mxu0
  %650 = vmatprep.mubr.bf16.mxu0 0
  %651 = vmatmul.mubr.bf16.gmra.mxu0 %v367
  %v652 = vpop.f32.mrf.mxu0
  %v653 = vadd.f32 %v99, %v652
  %v654 = vpop.f32.mrf.mxu0
  %v655 = vpop.f32.mrf.mxu0
  %v656 = vadd.f32 %v99, %v655
  %v657 = vpop.f32.mrf.mxu0
  %658 = vmatprep.mubr.bf16.mxu0 0
  %659 = vmatmul.mubr.bf16.gmra.mxu0 %v370
  %v660 = vpop.f32.mrf.mxu0
  %v661 = vadd.f32 %v99, %v660
  %v662 = vpop.f32.mrf.mxu0
  %v663 = vpop.f32.mrf.mxu0
  %v664 = vadd.f32 %v99, %v663
  %v665 = vpop.f32.mrf.mxu0
  %666 = vmatprep.mubr.bf16.mxu0 0
  %667 = vmatmul.mubr.bf16.gmra.mxu0 %v373
  %v668 = vpop.f32.mrf.mxu0
  %v669 = vadd.f32 %v99, %v668
  %v670 = vpop.f32.mrf.mxu0
  %v671 = vpop.f32.mrf.mxu0
  %v672 = vadd.f32 %v99, %v671
  %v673 = vpop.f32.mrf.mxu0
  %674 = vmatprep.mubr.bf16.mxu0 0
  %675 = vmatmul.mubr.bf16.gmra.mxu0 %v376
  %v676 = vpop.f32.mrf.mxu0
  %v677 = vadd.f32 %v99, %v676
  %v678 = vpop.f32.mrf.mxu0
  %v679 = vpop.f32.mrf.mxu0
  %v680 = vadd.f32 %v99, %v679
  %v681 = vpop.f32.mrf.mxu0
  %682 = vmatprep.mubr.bf16.mxu0 0
  %683 = vmatmul.mubr.bf16.gmra.mxu0 %v379
  %v684 = vpop.f32.mrf.mxu0
  %v685 = vadd.f32 %v99, %v684
  %v686 = vpop.f32.mrf.mxu0
  %v687 = vpop.f32.mrf.mxu0
  %v688 = vadd.f32 %v99, %v687
  %v689 = vpop.f32.mrf.mxu0
  %690 = vmatprep.mubr.bf16.mxu0 0
  %691 = vmatmul.mubr.bf16.gmra.mxu0 %v382
  %v692 = vpop.f32.mrf.mxu0
  %v693 = vadd.f32 %v99, %v692
  %v694 = vpop.f32.mrf.mxu0
  %v695 = vpop.f32.mrf.mxu0
  %v696 = vadd.f32 %v99, %v695
  %v697 = vpop.f32.mrf.mxu0
  %698 = vmatprep.mubr.bf16.mxu0 0
  %699 = vmatmul.mubr.bf16.gmra.mxu0 %v385
  %v700 = vpop.f32.mrf.mxu0
  %v701 = vadd.f32 %v99, %v700
  %v702 = vpop.f32.mrf.mxu0
  %v703 = vpop.f32.mrf.mxu0
  %v704 = vadd.f32 %v99, %v703
  %v705 = vpop.f32.mrf.mxu0
  %706 = vmatprep.mubr.bf16.mxu0 0
  %707 = vmatmul.mubr.bf16.gmra.mxu0 %v388
  %v708 = vpop.f32.mrf.mxu0
  %v709 = vadd.f32 %v99, %v708
  %v710 = vpop.f32.mrf.mxu0
  %v711 = vpop.f32.mrf.mxu0
  %v712 = vadd.f32 %v99, %v711
  %v713 = vpop.f32.mrf.mxu0
  %714 = vdwg.mxu0
  %v715 = vmax.f32 %v429, 0.0
  %v716 = vmax.f32 %v432, 0.0
  %v717 = vmax.f32 %v437, 0.0
  %v718 = vmax.f32 %v440, 0.0
  %v719 = vmax.f32 %v445, 0.0
  %v720 = vmax.f32 %v448, 0.0
  %v721 = vmax.f32 %v453, 0.0
  %v722 = vmax.f32 %v456, 0.0
  %v723 = vmax.f32 %v461, 0.0
  %v724 = vmax.f32 %v464, 0.0
  %v725 = vmax.f32 %v469, 0.0
  %v726 = vmax.f32 %v472, 0.0
  %v727 = vmax.f32 %v477, 0.0
  %v728 = vmax.f32 %v480, 0.0
  %v729 = vmax.f32 %v485, 0.0
  %v730 = vmax.f32 %v488, 0.0
  %v731 = vmax.f32 %v493, 0.0
  %v732 = vmax.f32 %v496, 0.0
  %v733 = vmax.f32 %v501, 0.0
  %v734 = vmax.f32 %v504, 0.0
  %v735 = vmax.f32 %v509, 0.0
  %v736 = vmax.f32 %v512, 0.0
  %v737 = vmax.f32 %v517, 0.0
  %v738 = vmax.f32 %v520, 0.0
  %v739 = vmax.f32 %v525, 0.0
  %v740 = vmax.f32 %v528, 0.0
  %v741 = vmax.f32 %v533, 0.0
  %v742 = vmax.f32 %v536, 0.0
  %v743 = vmax.f32 %v541, 0.0
  %v744 = vmax.f32 %v544, 0.0
  %v745 = vmax.f32 %v549, 0.0
  %v746 = vmax.f32 %v552, 0.0
  %v747 = vmax.f32 %v557, 0.0
  %v748 = vmax.f32 %v560, 0.0
  %v749 = vmax.f32 %v565, 0.0
  %v750 = vmax.f32 %v568, 0.0
  %v751 = vmax.f32 %v573, 0.0
  %v752 = vmax.f32 %v576, 0.0
  %v753 = vmax.f32 %v581, 0.0
  %v754 = vmax.f32 %v584, 0.0
  %v755 = vmax.f32 %v589, 0.0
  %v756 = vmax.f32 %v592, 0.0
  %v757 = vmax.f32 %v597, 0.0
  %v758 = vmax.f32 %v600, 0.0
  %v759 = vmax.f32 %v605, 0.0
  %v760 = vmax.f32 %v608, 0.0
  %v761 = vmax.f32 %v613, 0.0
  %v762 = vmax.f32 %v616, 0.0
  %v763 = vmax.f32 %v621, 0.0
  %v764 = vmax.f32 %v624, 0.0
  %v765 = vmax.f32 %v629, 0.0
  %v766 = vmax.f32 %v632, 0.0
  %v767 = vmax.f32 %v637, 0.0
  %v768 = vmax.f32 %v640, 0.0
  %v769 = vmax.f32 %v645, 0.0
  %v770 = vmax.f32 %v648, 0.0
  %v771 = vmax.f32 %v653, 0.0
  %v772 = vmax.f32 %v656, 0.0
  %v773 = vmax.f32 %v661, 0.0
  %v774 = vmax.f32 %v664, 0.0
  %v775 = vmax.f32 %v669, 0.0
  %v776 = vmax.f32 %v672, 0.0
  %v777 = vmax.f32 %v677, 0.0
  %v778 = vmax.f32 %v680, 0.0
  %v779 = vmax.f32 %v685, 0.0
  %v780 = vmax.f32 %v688, 0.0
  %v781 = vmax.f32 %v693, 0.0
  %v782 = vmax.f32 %v696, 0.0
  %v783 = vmax.f32 %v701, 0.0
  %v784 = vmax.f32 %v704, 0.0
  %v785 = vmax.f32 %v709, 0.0
  %v786 = vmax.f32 %v712, 0.0
  %v787 = vpack.c.bf16 %v716, %v715
  %v788 = vpack.c.bf16 %v718, %v717
  %v789 = vpack.c.bf16 %v720, %v719
  %v790 = vpack.c.bf16 %v722, %v721
  %v791 = vpack.c.bf16 %v724, %v723
  %v792 = vpack.c.bf16 %v726, %v725
  %v793 = vpack.c.bf16 %v728, %v727
  %v794 = vpack.c.bf16 %v730, %v729
  %v795 = vpack.c.bf16 %v732, %v731
  %v796 = vpack.c.bf16 %v734, %v733
  %v797 = vpack.c.bf16 %v736, %v735
  %v798 = vpack.c.bf16 %v738, %v737
  %v799 = vpack.c.bf16 %v740, %v739
  %v800 = vpack.c.bf16 %v742, %v741
  %v801 = vpack.c.bf16 %v744, %v743
  %v802 = vpack.c.bf16 %v746, %v745
  %v803 = vpack.c.bf16 %v748, %v747
  %v804 = vpack.c.bf16 %v750, %v749
  %v805 = vpack.c.bf16 %v752, %v751
  %v806 = vpack.c.bf16 %v754, %v753
  %v807 = vpack.c.bf16 %v756, %v755
  %v808 = vpack.c.bf16 %v758, %v757
  %v809 = vpack.c.bf16 %v760, %v759
  %v810 = vpack.c.bf16 %v762, %v761
  %v811 = vpack.c.bf16 %v764, %v763
  %v812 = vpack.c.bf16 %v766, %v765
  %v813 = vpack.c.bf16 %v768, %v767
  %v814 = vpack.c.bf16 %v770, %v769
  %v815 = vpack.c.bf16 %v772, %v771
  %v816 = vpack.c.bf16 %v774, %v773
  %v817 = vpack.c.bf16 %v776, %v775
  %v818 = vpack.c.bf16 %v778, %v777
  %v819 = vpack.c.bf16 %v780, %v779
  %v820 = vpack.c.bf16 %v782, %v781
  %v821 = vpack.c.bf16 %v784, %v783
  %v822 = vpack.c.bf16 %v786, %v785
  %v823 = vld [vmem:[%s3] sm:$0xf]
  %v824 = vld [vmem:[%s3 + $0x4] sm:$0xf]
  %v825 = vld [vmem:[%s4] sm:$0x1]
  %v827 = vlaneseq
  %v828 = vshrl.u32 %v827, 7
  %v829 = vsub.s32 0, %v828
  %v830 = vrot.slane %v825, %v829
  %v834 = vunpack.c.l.b16 %v823
  %v835 = vunpack.c.l.b16 %v824
  %v836 = vpack.c.b16 %v835, %v834
  %vm838 = vcmask 130048
  %v840 = vsel %vm838, %v787, 0
  %v843 = vsel %vm838, %v788, 0
  %v846 = vsel %vm838, %v789, 0
  %v849 = vsel %vm838, %v790, 0
  %v852 = vsel %vm838, %v791, 0
  %v855 = vsel %vm838, %v792, 0
  %v858 = vsel %vm838, %v793, 0
  %v861 = vsel %vm838, %v794, 0
  %v864 = vsel %vm838, %v795, 0
  %v867 = vsel %vm838, %v796, 0
  %v870 = vsel %vm838, %v797, 0
  %v873 = vsel %vm838, %v798, 0
  %v876 = vsel %vm838, %v799, 0
  %v879 = vsel %vm838, %v800, 0
  %v882 = vsel %vm838, %v801, 0
  %v885 = vsel %vm838, %v802, 0
  %v888 = vsel %vm838, %v803, 0
  %v891 = vsel %vm838, %v804, 0
  %v894 = vsel %vm838, %v805, 0
  %v897 = vsel %vm838, %v806, 0
  %v900 = vsel %vm838, %v807, 0
  %v903 = vsel %vm838, %v808, 0
  %v906 = vsel %vm838, %v809, 0
  %v909 = vsel %vm838, %v810, 0
  %v912 = vsel %vm838, %v811, 0
  %v915 = vsel %vm838, %v812, 0
  %v918 = vsel %vm838, %v813, 0
  %v921 = vsel %vm838, %v814, 0
  %v924 = vsel %vm838, %v815, 0
  %v927 = vsel %vm838, %v816, 0
  %v930 = vsel %vm838, %v817, 0
  %v933 = vsel %vm838, %v818, 0
  %v936 = vsel %vm838, %v819, 0
  %v939 = vsel %vm838, %v820, 0
  %v942 = vsel %vm838, %v821, 0
  %v945 = vsel %vm838, %v822, 0
  %947 = vmatprep.subr.bf16.mxu0 0
  %948 = vmatpush1.bf16.msra.mxu0 0
  %949 = vmatprep.subr.bf16.mxu0 0
  %950 = vmatpush1.bf16.msra.mxu0 0
  %951 = vmatprep.subr.bf16.mxu0 0
  %952 = vmatpush1.bf16.msra.mxu0 0
  %953 = vmatprep.subr.bf16.mxu0 0
  %954 = vmatpush1.bf16.msra.mxu0 0
  %955 = vmatprep.subr.bf16.mxu0 0
  %956 = vmatpush1.bf16.msra.mxu0 0
  %957 = vmatprep.subr.bf16.mxu0 0
  %958 = vmatpush1.bf16.msra.mxu0 0
  %959 = vmatprep.subr.bf16.mxu0 0
  %960 = vmatpush1.bf16.msra.mxu0 0
  %961 = vmatprep.subr.bf16.mxu0 0
  %962 = vmatpush1.bf16.msra.mxu0 %v836
  %963 = vmatprep.subr.bf16.mxu0 0
  %964 = vmatpush2.bf16.msra.mxu0 0
  %965 = vmatprep.subr.bf16.mxu0 0
  %966 = vmatpush2.bf16.msra.mxu0 0
  %967 = vmatprep.subr.bf16.mxu0 0
  %968 = vmatpush2.bf16.msra.mxu0 0
  %969 = vmatprep.subr.bf16.mxu0 0
  %970 = vmatpush2.bf16.msra.mxu0 0
  %971 = vmatprep.subr.bf16.mxu0 0
  %972 = vmatpush2.bf16.msra.mxu0 0
  %973 = vmatprep.subr.bf16.mxu0 0
  %974 = vmatpush2.bf16.msra.mxu0 0
  %975 = vmatprep.subr.bf16.mxu0 0
  %976 = vmatpush2.bf16.msra.mxu0 0
  %977 = vmatprep.subr.bf16.mxu0 0
  %978 = vmatpush2.bf16.msra.mxu0 0
  %979 = vmatprep.mubr.bf16.mxu0 0
  %980 = vmatmul.mubr.bf16.gmra.mxu0 %v840
  %v981 = vpop.f32.mrf.mxu0
  %v982 = vadd.f32 %v830, %v981
  %v983 = vpop.f32.mrf.mxu0
  %v984 = vpop.f32.mrf.mxu0
  %v985 = vadd.f32 %v830, %v984
  %v986 = vpop.f32.mrf.mxu0
  %987 = vmatprep.mubr.bf16.mxu0 0
  %988 = vmatmul.mubr.bf16.gmra.mxu0 %v843
  %v989 = vpop.f32.mrf.mxu0
  %v990 = vadd.f32 %v830, %v989
  %v991 = vpop.f32.mrf.mxu0
  %v992 = vpop.f32.mrf.mxu0
  %v993 = vadd.f32 %v830, %v992
  %v994 = vpop.f32.mrf.mxu0
  %995 = vmatprep.mubr.bf16.mxu0 0
  %996 = vmatmul.mubr.bf16.gmra.mxu0 %v846
  %v997 = vpop.f32.mrf.mxu0
  %v998 = vadd.f32 %v830, %v997
  %v999 = vpop.f32.mrf.mxu0
  %v1000 = vpop.f32.mrf.mxu0
  %v1001 = vadd.f32 %v830, %v1000
  %v1002 = vpop.f32.mrf.mxu0
  %1003 = vmatprep.mubr.bf16.mxu0 0
  %1004 = vmatmul.mubr.bf16.gmra.mxu0 %v849
  %v1005 = vpop.f32.mrf.mxu0
  %v1006 = vadd.f32 %v830, %v1005
  %v1007 = vpop.f32.mrf.mxu0
  %v1008 = vpop.f32.mrf.mxu0
  %v1009 = vadd.f32 %v830, %v1008
  %v1010 = vpop.f32.mrf.mxu0
  %1011 = vmatprep.mubr.bf16.mxu0 0
  %1012 = vmatmul.mubr.bf16.gmra.mxu0 %v852
  %v1013 = vpop.f32.mrf.mxu0
  %v1014 = vadd.f32 %v830, %v1013
  %v1015 = vpop.f32.mrf.mxu0
  %v1016 = vpop.f32.mrf.mxu0
  %v1017 = vadd.f32 %v830, %v1016
  %v1018 = vpop.f32.mrf.mxu0
  %1019 = vmatprep.mubr.bf16.mxu0 0
  %1020 = vmatmul.mubr.bf16.gmra.mxu0 %v855
  %v1021 = vpop.f32.mrf.mxu0
  %v1022 = vadd.f32 %v830, %v1021
  %v1023 = vpop.f32.mrf.mxu0
  %v1024 = vpop.f32.mrf.mxu0
  %v1025 = vadd.f32 %v830, %v1024
  %v1026 = vpop.f32.mrf.mxu0
  %1027 = vmatprep.mubr.bf16.mxu0 0
  %1028 = vmatmul.mubr.bf16.gmra.mxu0 %v858
  %v1029 = vpop.f32.mrf.mxu0
  %v1030 = vadd.f32 %v830, %v1029
  %v1031 = vpop.f32.mrf.mxu0
  %v1032 = vpop.f32.mrf.mxu0
  %v1033 = vadd.f32 %v830, %v1032
  %v1034 = vpop.f32.mrf.mxu0
  %1035 = vmatprep.mubr.bf16.mxu0 0
  %1036 = vmatmul.mubr.bf16.gmra.mxu0 %v861
  %v1037 = vpop.f32.mrf.mxu0
  %v1038 = vadd.f32 %v830, %v1037
  %v1039 = vpop.f32.mrf.mxu0
  %v1040 = vpop.f32.mrf.mxu0
  %v1041 = vadd.f32 %v830, %v1040
  %v1042 = vpop.f32.mrf.mxu0
  %1043 = vmatprep.mubr.bf16.mxu0 0
  %1044 = vmatmul.mubr.bf16.gmra.mxu0 %v864
  %v1045 = vpop.f32.mrf.mxu0
  %v1046 = vadd.f32 %v830, %v1045
  %v1047 = vpop.f32.mrf.mxu0
  %v1048 = vpop.f32.mrf.mxu0
  %v1049 = vadd.f32 %v830, %v1048
  %v1050 = vpop.f32.mrf.mxu0
  %1051 = vmatprep.mubr.bf16.mxu0 0
  %1052 = vmatmul.mubr.bf16.gmra.mxu0 %v867
  %v1053 = vpop.f32.mrf.mxu0
  %v1054 = vadd.f32 %v830, %v1053
  %v1055 = vpop.f32.mrf.mxu0
  %v1056 = vpop.f32.mrf.mxu0
  %v1057 = vadd.f32 %v830, %v1056
  %v1058 = vpop.f32.mrf.mxu0
  %1059 = vmatprep.mubr.bf16.mxu0 0
  %1060 = vmatmul.mubr.bf16.gmra.mxu0 %v870
  %v1061 = vpop.f32.mrf.mxu0
  %v1062 = vadd.f32 %v830, %v1061
  %v1063 = vpop.f32.mrf.mxu0
  %v1064 = vpop.f32.mrf.mxu0
  %v1065 = vadd.f32 %v830, %v1064
  %v1066 = vpop.f32.mrf.mxu0
  %1067 = vmatprep.mubr.bf16.mxu0 0
  %1068 = vmatmul.mubr.bf16.gmra.mxu0 %v873
  %v1069 = vpop.f32.mrf.mxu0
  %v1070 = vadd.f32 %v830, %v1069
  %v1071 = vpop.f32.mrf.mxu0
  %v1072 = vpop.f32.mrf.mxu0
  %v1073 = vadd.f32 %v830, %v1072
  %v1074 = vpop.f32.mrf.mxu0
  %1075 = vmatprep.mubr.bf16.mxu0 0
  %1076 = vmatmul.mubr.bf16.gmra.mxu0 %v876
  %v1077 = vpop.f32.mrf.mxu0
  %v1078 = vadd.f32 %v830, %v1077
  %v1079 = vpop.f32.mrf.mxu0
  %v1080 = vpop.f32.mrf.mxu0
  %v1081 = vadd.f32 %v830, %v1080
  %v1082 = vpop.f32.mrf.mxu0
  %1083 = vmatprep.mubr.bf16.mxu0 0
  %1084 = vmatmul.mubr.bf16.gmra.mxu0 %v879
  %v1085 = vpop.f32.mrf.mxu0
  %v1086 = vadd.f32 %v830, %v1085
  %v1087 = vpop.f32.mrf.mxu0
  %v1088 = vpop.f32.mrf.mxu0
  %v1089 = vadd.f32 %v830, %v1088
  %v1090 = vpop.f32.mrf.mxu0
  %1091 = vmatprep.mubr.bf16.mxu0 0
  %1092 = vmatmul.mubr.bf16.gmra.mxu0 %v882
  %v1093 = vpop.f32.mrf.mxu0
  %v1094 = vadd.f32 %v830, %v1093
  %v1095 = vpop.f32.mrf.mxu0
  %v1096 = vpop.f32.mrf.mxu0
  %v1097 = vadd.f32 %v830, %v1096
  %v1098 = vpop.f32.mrf.mxu0
  %1099 = vmatprep.mubr.bf16.mxu0 0
  %1100 = vmatmul.mubr.bf16.gmra.mxu0 %v885
  %v1101 = vpop.f32.mrf.mxu0
  %v1102 = vadd.f32 %v830, %v1101
  %v1103 = vpop.f32.mrf.mxu0
  %v1104 = vpop.f32.mrf.mxu0
  %v1105 = vadd.f32 %v830, %v1104
  %v1106 = vpop.f32.mrf.mxu0
  %1107 = vmatprep.mubr.bf16.mxu0 0
  %1108 = vmatmul.mubr.bf16.gmra.mxu0 %v888
  %v1109 = vpop.f32.mrf.mxu0
  %v1110 = vadd.f32 %v830, %v1109
  %v1111 = vpop.f32.mrf.mxu0
  %v1112 = vpop.f32.mrf.mxu0
  %v1113 = vadd.f32 %v830, %v1112
  %v1114 = vpop.f32.mrf.mxu0
  %1115 = vmatprep.mubr.bf16.mxu0 0
  %1116 = vmatmul.mubr.bf16.gmra.mxu0 %v891
  %v1117 = vpop.f32.mrf.mxu0
  %v1118 = vadd.f32 %v830, %v1117
  %v1119 = vpop.f32.mrf.mxu0
  %v1120 = vpop.f32.mrf.mxu0
  %v1121 = vadd.f32 %v830, %v1120
  %v1122 = vpop.f32.mrf.mxu0
  %1123 = vmatprep.mubr.bf16.mxu0 0
  %1124 = vmatmul.mubr.bf16.gmra.mxu0 %v894
  %v1125 = vpop.f32.mrf.mxu0
  %v1126 = vadd.f32 %v830, %v1125
  %v1127 = vpop.f32.mrf.mxu0
  %v1128 = vpop.f32.mrf.mxu0
  %v1129 = vadd.f32 %v830, %v1128
  %v1130 = vpop.f32.mrf.mxu0
  %1131 = vmatprep.mubr.bf16.mxu0 0
  %1132 = vmatmul.mubr.bf16.gmra.mxu0 %v897
  %v1133 = vpop.f32.mrf.mxu0
  %v1134 = vadd.f32 %v830, %v1133
  %v1135 = vpop.f32.mrf.mxu0
  %v1136 = vpop.f32.mrf.mxu0
  %v1137 = vadd.f32 %v830, %v1136
  %v1138 = vpop.f32.mrf.mxu0
  %1139 = vmatprep.mubr.bf16.mxu0 0
  %1140 = vmatmul.mubr.bf16.gmra.mxu0 %v900
  %v1141 = vpop.f32.mrf.mxu0
  %v1142 = vadd.f32 %v830, %v1141
  %v1143 = vpop.f32.mrf.mxu0
  %v1144 = vpop.f32.mrf.mxu0
  %v1145 = vadd.f32 %v830, %v1144
  %v1146 = vpop.f32.mrf.mxu0
  %1147 = vmatprep.mubr.bf16.mxu0 0
  %1148 = vmatmul.mubr.bf16.gmra.mxu0 %v903
  %v1149 = vpop.f32.mrf.mxu0
  %v1150 = vadd.f32 %v830, %v1149
  %v1151 = vpop.f32.mrf.mxu0
  %v1152 = vpop.f32.mrf.mxu0
  %v1153 = vadd.f32 %v830, %v1152
  %v1154 = vpop.f32.mrf.mxu0
  %1155 = vmatprep.mubr.bf16.mxu0 0
  %1156 = vmatmul.mubr.bf16.gmra.mxu0 %v906
  %v1157 = vpop.f32.mrf.mxu0
  %v1158 = vadd.f32 %v830, %v1157
  %v1159 = vpop.f32.mrf.mxu0
  %v1160 = vpop.f32.mrf.mxu0
  %v1161 = vadd.f32 %v830, %v1160
  %v1162 = vpop.f32.mrf.mxu0
  %1163 = vmatprep.mubr.bf16.mxu0 0
  %1164 = vmatmul.mubr.bf16.gmra.mxu0 %v909
  %v1165 = vpop.f32.mrf.mxu0
  %v1166 = vadd.f32 %v830, %v1165
  %v1167 = vpop.f32.mrf.mxu0
  %v1168 = vpop.f32.mrf.mxu0
  %v1169 = vadd.f32 %v830, %v1168
  %v1170 = vpop.f32.mrf.mxu0
  %1171 = vmatprep.mubr.bf16.mxu0 0
  %1172 = vmatmul.mubr.bf16.gmra.mxu0 %v912
  %v1173 = vpop.f32.mrf.mxu0
  %v1174 = vadd.f32 %v830, %v1173
  %v1175 = vpop.f32.mrf.mxu0
  %v1176 = vpop.f32.mrf.mxu0
  %v1177 = vadd.f32 %v830, %v1176
  %v1178 = vpop.f32.mrf.mxu0
  %1179 = vmatprep.mubr.bf16.mxu0 0
  %1180 = vmatmul.mubr.bf16.gmra.mxu0 %v915
  %v1181 = vpop.f32.mrf.mxu0
  %v1182 = vadd.f32 %v830, %v1181
  %v1183 = vpop.f32.mrf.mxu0
  %v1184 = vpop.f32.mrf.mxu0
  %v1185 = vadd.f32 %v830, %v1184
  %v1186 = vpop.f32.mrf.mxu0
  %1187 = vmatprep.mubr.bf16.mxu0 0
  %1188 = vmatmul.mubr.bf16.gmra.mxu0 %v918
  %v1189 = vpop.f32.mrf.mxu0
  %v1190 = vadd.f32 %v830, %v1189
  %v1191 = vpop.f32.mrf.mxu0
  %v1192 = vpop.f32.mrf.mxu0
  %v1193 = vadd.f32 %v830, %v1192
  %v1194 = vpop.f32.mrf.mxu0
  %1195 = vmatprep.mubr.bf16.mxu0 0
  %1196 = vmatmul.mubr.bf16.gmra.mxu0 %v921
  %v1197 = vpop.f32.mrf.mxu0
  %v1198 = vadd.f32 %v830, %v1197
  %v1199 = vpop.f32.mrf.mxu0
  %v1200 = vpop.f32.mrf.mxu0
  %v1201 = vadd.f32 %v830, %v1200
  %v1202 = vpop.f32.mrf.mxu0
  %1203 = vmatprep.mubr.bf16.mxu0 0
  %1204 = vmatmul.mubr.bf16.gmra.mxu0 %v924
  %v1205 = vpop.f32.mrf.mxu0
  %v1206 = vadd.f32 %v830, %v1205
  %v1207 = vpop.f32.mrf.mxu0
  %v1208 = vpop.f32.mrf.mxu0
  %v1209 = vadd.f32 %v830, %v1208
  %v1210 = vpop.f32.mrf.mxu0
  %1211 = vmatprep.mubr.bf16.mxu0 0
  %1212 = vmatmul.mubr.bf16.gmra.mxu0 %v927
  %v1213 = vpop.f32.mrf.mxu0
  %v1214 = vadd.f32 %v830, %v1213
  %v1215 = vpop.f32.mrf.mxu0
  %v1216 = vpop.f32.mrf.mxu0
  %v1217 = vadd.f32 %v830, %v1216
  %v1218 = vpop.f32.mrf.mxu0
  %1219 = vmatprep.mubr.bf16.mxu0 0
  %1220 = vmatmul.mubr.bf16.gmra.mxu0 %v930
  %v1221 = vpop.f32.mrf.mxu0
  %v1222 = vadd.f32 %v830, %v1221
  %v1223 = vpop.f32.mrf.mxu0
  %v1224 = vpop.f32.mrf.mxu0
  %v1225 = vadd.f32 %v830, %v1224
  %v1226 = vpop.f32.mrf.mxu0
  %1227 = vmatprep.mubr.bf16.mxu0 0
  %1228 = vmatmul.mubr.bf16.gmra.mxu0 %v933
  %v1229 = vpop.f32.mrf.mxu0
  %v1230 = vadd.f32 %v830, %v1229
  %v1231 = vpop.f32.mrf.mxu0
  %v1232 = vpop.f32.mrf.mxu0
  %v1233 = vadd.f32 %v830, %v1232
  %v1234 = vpop.f32.mrf.mxu0
  %1235 = vmatprep.mubr.bf16.mxu0 0
  %1236 = vmatmul.mubr.bf16.gmra.mxu0 %v936
  %v1237 = vpop.f32.mrf.mxu0
  %v1238 = vadd.f32 %v830, %v1237
  %v1239 = vpop.f32.mrf.mxu0
  %v1240 = vpop.f32.mrf.mxu0
  %v1241 = vadd.f32 %v830, %v1240
  %v1242 = vpop.f32.mrf.mxu0
  %1243 = vmatprep.mubr.bf16.mxu0 0
  %1244 = vmatmul.mubr.bf16.gmra.mxu0 %v939
  %v1245 = vpop.f32.mrf.mxu0
  %v1246 = vadd.f32 %v830, %v1245
  %v1247 = vpop.f32.mrf.mxu0
  %v1248 = vpop.f32.mrf.mxu0
  %v1249 = vadd.f32 %v830, %v1248
  %v1250 = vpop.f32.mrf.mxu0
  %1251 = vmatprep.mubr.bf16.mxu0 0
  %1252 = vmatmul.mubr.bf16.gmra.mxu0 %v942
  %v1253 = vpop.f32.mrf.mxu0
  %v1254 = vadd.f32 %v830, %v1253
  %v1255 = vpop.f32.mrf.mxu0
  %v1256 = vpop.f32.mrf.mxu0
  %v1257 = vadd.f32 %v830, %v1256
  %v1258 = vpop.f32.mrf.mxu0
  %1259 = vmatprep.mubr.bf16.mxu0 0
  %1260 = vmatmul.mubr.bf16.gmra.mxu0 %v945
  %v1261 = vpop.f32.mrf.mxu0
  %v1262 = vadd.f32 %v830, %v1261
  %v1263 = vpop.f32.mrf.mxu0
  %v1264 = vpop.f32.mrf.mxu0
  %v1265 = vadd.f32 %v830, %v1264
  %v1266 = vpop.f32.mrf.mxu0
  %1267 = vdwg.mxu0
  %v1268 = vmax.f32 %v982, 0.0
  %v1269 = vmax.f32 %v985, 0.0
  %v1270 = vmax.f32 %v990, 0.0
  %v1271 = vmax.f32 %v993, 0.0
  %v1272 = vmax.f32 %v998, 0.0
  %v1273 = vmax.f32 %v1001, 0.0
  %v1274 = vmax.f32 %v1006, 0.0
  %v1275 = vmax.f32 %v1009, 0.0
  %v1276 = vmax.f32 %v1014, 0.0
  %v1277 = vmax.f32 %v1017, 0.0
  %v1278 = vmax.f32 %v1022, 0.0
  %v1279 = vmax.f32 %v1025, 0.0
  %v1280 = vmax.f32 %v1030, 0.0
  %v1281 = vmax.f32 %v1033, 0.0
  %v1282 = vmax.f32 %v1038, 0.0
  %v1283 = vmax.f32 %v1041, 0.0
  %v1284 = vmax.f32 %v1046, 0.0
  %v1285 = vmax.f32 %v1049, 0.0
  %v1286 = vmax.f32 %v1054, 0.0
  %v1287 = vmax.f32 %v1057, 0.0
  %v1288 = vmax.f32 %v1062, 0.0
  %v1289 = vmax.f32 %v1065, 0.0
  %v1290 = vmax.f32 %v1070, 0.0
  %v1291 = vmax.f32 %v1073, 0.0
  %v1292 = vmax.f32 %v1078, 0.0
  %v1293 = vmax.f32 %v1081, 0.0
  %v1294 = vmax.f32 %v1086, 0.0
  %v1295 = vmax.f32 %v1089, 0.0
  %v1296 = vmax.f32 %v1094, 0.0
  %v1297 = vmax.f32 %v1097, 0.0
  %v1298 = vmax.f32 %v1102, 0.0
  %v1299 = vmax.f32 %v1105, 0.0
  %v1300 = vmax.f32 %v1110, 0.0
  %v1301 = vmax.f32 %v1113, 0.0
  %v1302 = vmax.f32 %v1118, 0.0
  %v1303 = vmax.f32 %v1121, 0.0
  %v1304 = vmax.f32 %v1126, 0.0
  %v1305 = vmax.f32 %v1129, 0.0
  %v1306 = vmax.f32 %v1134, 0.0
  %v1307 = vmax.f32 %v1137, 0.0
  %v1308 = vmax.f32 %v1142, 0.0
  %v1309 = vmax.f32 %v1145, 0.0
  %v1310 = vmax.f32 %v1150, 0.0
  %v1311 = vmax.f32 %v1153, 0.0
  %v1312 = vmax.f32 %v1158, 0.0
  %v1313 = vmax.f32 %v1161, 0.0
  %v1314 = vmax.f32 %v1166, 0.0
  %v1315 = vmax.f32 %v1169, 0.0
  %v1316 = vmax.f32 %v1174, 0.0
  %v1317 = vmax.f32 %v1177, 0.0
  %v1318 = vmax.f32 %v1182, 0.0
  %v1319 = vmax.f32 %v1185, 0.0
  %v1320 = vmax.f32 %v1190, 0.0
  %v1321 = vmax.f32 %v1193, 0.0
  %v1322 = vmax.f32 %v1198, 0.0
  %v1323 = vmax.f32 %v1201, 0.0
  %v1324 = vmax.f32 %v1206, 0.0
  %v1325 = vmax.f32 %v1209, 0.0
  %v1326 = vmax.f32 %v1214, 0.0
  %v1327 = vmax.f32 %v1217, 0.0
  %v1328 = vmax.f32 %v1222, 0.0
  %v1329 = vmax.f32 %v1225, 0.0
  %v1330 = vmax.f32 %v1230, 0.0
  %v1331 = vmax.f32 %v1233, 0.0
  %v1332 = vmax.f32 %v1238, 0.0
  %v1333 = vmax.f32 %v1241, 0.0
  %v1334 = vmax.f32 %v1246, 0.0
  %v1335 = vmax.f32 %v1249, 0.0
  %v1336 = vmax.f32 %v1254, 0.0
  %v1337 = vmax.f32 %v1257, 0.0
  %v1338 = vmax.f32 %v1262, 0.0
  %v1339 = vmax.f32 %v1265, 0.0
  %vm1340 = vcmask 261120
  %v1341 = vsel %vm1340, %v1268, -inf
  %v1342 = vrot.slane %v1341, 4
  %v1343 = vmax.f32 %v1341, %v1342
  %v1344 = vrot.slane %v1343, 2
  %v1345 = vmax.f32 %v1343, %v1344
  %v1346 = vrot.slane %v1345, 1
  %v1347 = vmax.f32 %v1345, %v1346
  %v1348 = vsel %vm1340, %v1269, -inf
  %v1349 = vrot.slane %v1348, 4
  %v1350 = vmax.f32 %v1348, %v1349
  %v1351 = vrot.slane %v1350, 2
  %v1352 = vmax.f32 %v1350, %v1351
  %v1353 = vrot.slane %v1352, 1
  %v1354 = vmax.f32 %v1352, %v1353
  %v1355 = vsel %vm1340, %v1270, -inf
  %v1356 = vrot.slane %v1355, 4
  %v1357 = vmax.f32 %v1355, %v1356
  %v1358 = vrot.slane %v1357, 2
  %v1359 = vmax.f32 %v1357, %v1358
  %v1360 = vrot.slane %v1359, 1
  %v1361 = vmax.f32 %v1359, %v1360
  %v1362 = vsel %vm1340, %v1271, -inf
  %v1363 = vrot.slane %v1362, 4
  %v1364 = vmax.f32 %v1362, %v1363
  %v1365 = vrot.slane %v1364, 2
  %v1366 = vmax.f32 %v1364, %v1365
  %v1367 = vrot.slane %v1366, 1
  %v1368 = vmax.f32 %v1366, %v1367
  %v1369 = vsel %vm1340, %v1272, -inf
  %v1370 = vrot.slane %v1369, 4
  %v1371 = vmax.f32 %v1369, %v1370
  %v1372 = vrot.slane %v1371, 2
  %v1373 = vmax.f32 %v1371, %v1372
  %v1374 = vrot.slane %v1373, 1
  %v1375 = vmax.f32 %v1373, %v1374
  %v1376 = vsel %vm1340, %v1273, -inf
  %v1377 = vrot.slane %v1376, 4
  %v1378 = vmax.f32 %v1376, %v1377
  %v1379 = vrot.slane %v1378, 2
  %v1380 = vmax.f32 %v1378, %v1379
  %v1381 = vrot.slane %v1380, 1
  %v1382 = vmax.f32 %v1380, %v1381
  %v1383 = vsel %vm1340, %v1274, -inf
  %v1384 = vrot.slane %v1383, 4
  %v1385 = vmax.f32 %v1383, %v1384
  %v1386 = vrot.slane %v1385, 2
  %v1387 = vmax.f32 %v1385, %v1386
  %v1388 = vrot.slane %v1387, 1
  %v1389 = vmax.f32 %v1387, %v1388
  %v1390 = vsel %vm1340, %v1275, -inf
  %v1391 = vrot.slane %v1390, 4
  %v1392 = vmax.f32 %v1390, %v1391
  %v1393 = vrot.slane %v1392, 2
  %v1394 = vmax.f32 %v1392, %v1393
  %v1395 = vrot.slane %v1394, 1
  %v1396 = vmax.f32 %v1394, %v1395
  %v1397 = vsel %vm1340, %v1276, -inf
  %v1398 = vrot.slane %v1397, 4
  %v1399 = vmax.f32 %v1397, %v1398
  %v1400 = vrot.slane %v1399, 2
  %v1401 = vmax.f32 %v1399, %v1400
  %v1402 = vrot.slane %v1401, 1
  %v1403 = vmax.f32 %v1401, %v1402
  %v1404 = vsel %vm1340, %v1277, -inf
  %v1405 = vrot.slane %v1404, 4
  %v1406 = vmax.f32 %v1404, %v1405
  %v1407 = vrot.slane %v1406, 2
  %v1408 = vmax.f32 %v1406, %v1407
  %v1409 = vrot.slane %v1408, 1
  %v1410 = vmax.f32 %v1408, %v1409
  %v1411 = vsel %vm1340, %v1278, -inf
  %v1412 = vrot.slane %v1411, 4
  %v1413 = vmax.f32 %v1411, %v1412
  %v1414 = vrot.slane %v1413, 2
  %v1415 = vmax.f32 %v1413, %v1414
  %v1416 = vrot.slane %v1415, 1
  %v1417 = vmax.f32 %v1415, %v1416
  %v1418 = vsel %vm1340, %v1279, -inf
  %v1419 = vrot.slane %v1418, 4
  %v1420 = vmax.f32 %v1418, %v1419
  %v1421 = vrot.slane %v1420, 2
  %v1422 = vmax.f32 %v1420, %v1421
  %v1423 = vrot.slane %v1422, 1
  %v1424 = vmax.f32 %v1422, %v1423
  %v1425 = vsel %vm1340, %v1280, -inf
  %v1426 = vrot.slane %v1425, 4
  %v1427 = vmax.f32 %v1425, %v1426
  %v1428 = vrot.slane %v1427, 2
  %v1429 = vmax.f32 %v1427, %v1428
  %v1430 = vrot.slane %v1429, 1
  %v1431 = vmax.f32 %v1429, %v1430
  %v1432 = vsel %vm1340, %v1281, -inf
  %v1433 = vrot.slane %v1432, 4
  %v1434 = vmax.f32 %v1432, %v1433
  %v1435 = vrot.slane %v1434, 2
  %v1436 = vmax.f32 %v1434, %v1435
  %v1437 = vrot.slane %v1436, 1
  %v1438 = vmax.f32 %v1436, %v1437
  %v1439 = vsel %vm1340, %v1282, -inf
  %v1440 = vrot.slane %v1439, 4
  %v1441 = vmax.f32 %v1439, %v1440
  %v1442 = vrot.slane %v1441, 2
  %v1443 = vmax.f32 %v1441, %v1442
  %v1444 = vrot.slane %v1443, 1
  %v1445 = vmax.f32 %v1443, %v1444
  %v1446 = vsel %vm1340, %v1283, -inf
  %v1447 = vrot.slane %v1446, 4
  %v1448 = vmax.f32 %v1446, %v1447
  %v1449 = vrot.slane %v1448, 2
  %v1450 = vmax.f32 %v1448, %v1449
  %v1451 = vrot.slane %v1450, 1
  %v1452 = vmax.f32 %v1450, %v1451
  %v1453 = vsel %vm1340, %v1284, -inf
  %v1454 = vrot.slane %v1453, 4
  %v1455 = vmax.f32 %v1453, %v1454
  %v1456 = vrot.slane %v1455, 2
  %v1457 = vmax.f32 %v1455, %v1456
  %v1458 = vrot.slane %v1457, 1
  %v1459 = vmax.f32 %v1457, %v1458
  %v1460 = vsel %vm1340, %v1285, -inf
  %v1461 = vrot.slane %v1460, 4
  %v1462 = vmax.f32 %v1460, %v1461
  %v1463 = vrot.slane %v1462, 2
  %v1464 = vmax.f32 %v1462, %v1463
  %v1465 = vrot.slane %v1464, 1
  %v1466 = vmax.f32 %v1464, %v1465
  %v1467 = vsel %vm1340, %v1286, -inf
  %v1468 = vrot.slane %v1467, 4
  %v1469 = vmax.f32 %v1467, %v1468
  %v1470 = vrot.slane %v1469, 2
  %v1471 = vmax.f32 %v1469, %v1470
  %v1472 = vrot.slane %v1471, 1
  %v1473 = vmax.f32 %v1471, %v1472
  %v1474 = vsel %vm1340, %v1287, -inf
  %v1475 = vrot.slane %v1474, 4
  %v1476 = vmax.f32 %v1474, %v1475
  %v1477 = vrot.slane %v1476, 2
  %v1478 = vmax.f32 %v1476, %v1477
  %v1479 = vrot.slane %v1478, 1
  %v1480 = vmax.f32 %v1478, %v1479
  %v1481 = vsel %vm1340, %v1288, -inf
  %v1482 = vrot.slane %v1481, 4
  %v1483 = vmax.f32 %v1481, %v1482
  %v1484 = vrot.slane %v1483, 2
  %v1485 = vmax.f32 %v1483, %v1484
  %v1486 = vrot.slane %v1485, 1
  %v1487 = vmax.f32 %v1485, %v1486
  %v1488 = vsel %vm1340, %v1289, -inf
  %v1489 = vrot.slane %v1488, 4
  %v1490 = vmax.f32 %v1488, %v1489
  %v1491 = vrot.slane %v1490, 2
  %v1492 = vmax.f32 %v1490, %v1491
  %v1493 = vrot.slane %v1492, 1
  %v1494 = vmax.f32 %v1492, %v1493
  %v1495 = vsel %vm1340, %v1290, -inf
  %v1496 = vrot.slane %v1495, 4
  %v1497 = vmax.f32 %v1495, %v1496
  %v1498 = vrot.slane %v1497, 2
  %v1499 = vmax.f32 %v1497, %v1498
  %v1500 = vrot.slane %v1499, 1
  %v1501 = vmax.f32 %v1499, %v1500
  %v1502 = vsel %vm1340, %v1291, -inf
  %v1503 = vrot.slane %v1502, 4
  %v1504 = vmax.f32 %v1502, %v1503
  %v1505 = vrot.slane %v1504, 2
  %v1506 = vmax.f32 %v1504, %v1505
  %v1507 = vrot.slane %v1506, 1
  %v1508 = vmax.f32 %v1506, %v1507
  %v1509 = vsel %vm1340, %v1292, -inf
  %v1510 = vrot.slane %v1509, 4
  %v1511 = vmax.f32 %v1509, %v1510
  %v1512 = vrot.slane %v1511, 2
  %v1513 = vmax.f32 %v1511, %v1512
  %v1514 = vrot.slane %v1513, 1
  %v1515 = vmax.f32 %v1513, %v1514
  %v1516 = vsel %vm1340, %v1293, -inf
  %v1517 = vrot.slane %v1516, 4
  %v1518 = vmax.f32 %v1516, %v1517
  %v1519 = vrot.slane %v1518, 2
  %v1520 = vmax.f32 %v1518, %v1519
  %v1521 = vrot.slane %v1520, 1
  %v1522 = vmax.f32 %v1520, %v1521
  %v1523 = vsel %vm1340, %v1294, -inf
  %v1524 = vrot.slane %v1523, 4
  %v1525 = vmax.f32 %v1523, %v1524
  %v1526 = vrot.slane %v1525, 2
  %v1527 = vmax.f32 %v1525, %v1526
  %v1528 = vrot.slane %v1527, 1
  %v1529 = vmax.f32 %v1527, %v1528
  %v1530 = vsel %vm1340, %v1295, -inf
  %v1531 = vrot.slane %v1530, 4
  %v1532 = vmax.f32 %v1530, %v1531
  %v1533 = vrot.slane %v1532, 2
  %v1534 = vmax.f32 %v1532, %v1533
  %v1535 = vrot.slane %v1534, 1
  %v1536 = vmax.f32 %v1534, %v1535
  %v1537 = vsel %vm1340, %v1296, -inf
  %v1538 = vrot.slane %v1537, 4
  %v1539 = vmax.f32 %v1537, %v1538
  %v1540 = vrot.slane %v1539, 2
  %v1541 = vmax.f32 %v1539, %v1540
  %v1542 = vrot.slane %v1541, 1
  %v1543 = vmax.f32 %v1541, %v1542
  %v1544 = vsel %vm1340, %v1297, -inf
  %v1545 = vrot.slane %v1544, 4
  %v1546 = vmax.f32 %v1544, %v1545
  %v1547 = vrot.slane %v1546, 2
  %v1548 = vmax.f32 %v1546, %v1547
  %v1549 = vrot.slane %v1548, 1
  %v1550 = vmax.f32 %v1548, %v1549
  %v1551 = vsel %vm1340, %v1298, -inf
  %v1552 = vrot.slane %v1551, 4
  %v1553 = vmax.f32 %v1551, %v1552
  %v1554 = vrot.slane %v1553, 2
  %v1555 = vmax.f32 %v1553, %v1554
  %v1556 = vrot.slane %v1555, 1
  %v1557 = vmax.f32 %v1555, %v1556
  %v1558 = vsel %vm1340, %v1299, -inf
  %v1559 = vrot.slane %v1558, 4
  %v1560 = vmax.f32 %v1558, %v1559
  %v1561 = vrot.slane %v1560, 2
  %v1562 = vmax.f32 %v1560, %v1561
  %v1563 = vrot.slane %v1562, 1
  %v1564 = vmax.f32 %v1562, %v1563
  %v1565 = vsel %vm1340, %v1300, -inf
  %v1566 = vrot.slane %v1565, 4
  %v1567 = vmax.f32 %v1565, %v1566
  %v1568 = vrot.slane %v1567, 2
  %v1569 = vmax.f32 %v1567, %v1568
  %v1570 = vrot.slane %v1569, 1
  %v1571 = vmax.f32 %v1569, %v1570
  %v1572 = vsel %vm1340, %v1301, -inf
  %v1573 = vrot.slane %v1572, 4
  %v1574 = vmax.f32 %v1572, %v1573
  %v1575 = vrot.slane %v1574, 2
  %v1576 = vmax.f32 %v1574, %v1575
  %v1577 = vrot.slane %v1576, 1
  %v1578 = vmax.f32 %v1576, %v1577
  %v1579 = vsel %vm1340, %v1302, -inf
  %v1580 = vrot.slane %v1579, 4
  %v1581 = vmax.f32 %v1579, %v1580
  %v1582 = vrot.slane %v1581, 2
  %v1583 = vmax.f32 %v1581, %v1582
  %v1584 = vrot.slane %v1583, 1
  %v1585 = vmax.f32 %v1583, %v1584
  %v1586 = vsel %vm1340, %v1303, -inf
  %v1587 = vrot.slane %v1586, 4
  %v1588 = vmax.f32 %v1586, %v1587
  %v1589 = vrot.slane %v1588, 2
  %v1590 = vmax.f32 %v1588, %v1589
  %v1591 = vrot.slane %v1590, 1
  %v1592 = vmax.f32 %v1590, %v1591
  %v1593 = vsel %vm1340, %v1304, -inf
  %v1594 = vrot.slane %v1593, 4
  %v1595 = vmax.f32 %v1593, %v1594
  %v1596 = vrot.slane %v1595, 2
  %v1597 = vmax.f32 %v1595, %v1596
  %v1598 = vrot.slane %v1597, 1
  %v1599 = vmax.f32 %v1597, %v1598
  %v1600 = vsel %vm1340, %v1305, -inf
  %v1601 = vrot.slane %v1600, 4
  %v1602 = vmax.f32 %v1600, %v1601
  %v1603 = vrot.slane %v1602, 2
  %v1604 = vmax.f32 %v1602, %v1603
  %v1605 = vrot.slane %v1604, 1
  %v1606 = vmax.f32 %v1604, %v1605
  %v1607 = vsel %vm1340, %v1306, -inf
  %v1608 = vrot.slane %v1607, 4
  %v1609 = vmax.f32 %v1607, %v1608
  %v1610 = vrot.slane %v1609, 2
  %v1611 = vmax.f32 %v1609, %v1610
  %v1612 = vrot.slane %v1611, 1
  %v1613 = vmax.f32 %v1611, %v1612
  %v1614 = vsel %vm1340, %v1307, -inf
  %v1615 = vrot.slane %v1614, 4
  %v1616 = vmax.f32 %v1614, %v1615
  %v1617 = vrot.slane %v1616, 2
  %v1618 = vmax.f32 %v1616, %v1617
  %v1619 = vrot.slane %v1618, 1
  %v1620 = vmax.f32 %v1618, %v1619
  %v1621 = vsel %vm1340, %v1308, -inf
  %v1622 = vrot.slane %v1621, 4
  %v1623 = vmax.f32 %v1621, %v1622
  %v1624 = vrot.slane %v1623, 2
  %v1625 = vmax.f32 %v1623, %v1624
  %v1626 = vrot.slane %v1625, 1
  %v1627 = vmax.f32 %v1625, %v1626
  %v1628 = vsel %vm1340, %v1309, -inf
  %v1629 = vrot.slane %v1628, 4
  %v1630 = vmax.f32 %v1628, %v1629
  %v1631 = vrot.slane %v1630, 2
  %v1632 = vmax.f32 %v1630, %v1631
  %v1633 = vrot.slane %v1632, 1
  %v1634 = vmax.f32 %v1632, %v1633
  %v1635 = vsel %vm1340, %v1310, -inf
  %v1636 = vrot.slane %v1635, 4
  %v1637 = vmax.f32 %v1635, %v1636
  %v1638 = vrot.slane %v1637, 2
  %v1639 = vmax.f32 %v1637, %v1638
  %v1640 = vrot.slane %v1639, 1
  %v1641 = vmax.f32 %v1639, %v1640
  %v1642 = vsel %vm1340, %v1311, -inf
  %v1643 = vrot.slane %v1642, 4
  %v1644 = vmax.f32 %v1642, %v1643
  %v1645 = vrot.slane %v1644, 2
  %v1646 = vmax.f32 %v1644, %v1645
  %v1647 = vrot.slane %v1646, 1
  %v1648 = vmax.f32 %v1646, %v1647
  %v1649 = vsel %vm1340, %v1312, -inf
  %v1650 = vrot.slane %v1649, 4
  %v1651 = vmax.f32 %v1649, %v1650
  %v1652 = vrot.slane %v1651, 2
  %v1653 = vmax.f32 %v1651, %v1652
  %v1654 = vrot.slane %v1653, 1
  %v1655 = vmax.f32 %v1653, %v1654
  %v1656 = vsel %vm1340, %v1313, -inf
  %v1657 = vrot.slane %v1656, 4
  %v1658 = vmax.f32 %v1656, %v1657
  %v1659 = vrot.slane %v1658, 2
  %v1660 = vmax.f32 %v1658, %v1659
  %v1661 = vrot.slane %v1660, 1
  %v1662 = vmax.f32 %v1660, %v1661
  %v1663 = vsel %vm1340, %v1314, -inf
  %v1664 = vrot.slane %v1663, 4
  %v1665 = vmax.f32 %v1663, %v1664
  %v1666 = vrot.slane %v1665, 2
  %v1667 = vmax.f32 %v1665, %v1666
  %v1668 = vrot.slane %v1667, 1
  %v1669 = vmax.f32 %v1667, %v1668
  %v1670 = vsel %vm1340, %v1315, -inf
  %v1671 = vrot.slane %v1670, 4
  %v1672 = vmax.f32 %v1670, %v1671
  %v1673 = vrot.slane %v1672, 2
  %v1674 = vmax.f32 %v1672, %v1673
  %v1675 = vrot.slane %v1674, 1
  %v1676 = vmax.f32 %v1674, %v1675
  %v1677 = vsel %vm1340, %v1316, -inf
  %v1678 = vrot.slane %v1677, 4
  %v1679 = vmax.f32 %v1677, %v1678
  %v1680 = vrot.slane %v1679, 2
  %v1681 = vmax.f32 %v1679, %v1680
  %v1682 = vrot.slane %v1681, 1
  %v1683 = vmax.f32 %v1681, %v1682
  %v1684 = vsel %vm1340, %v1317, -inf
  %v1685 = vrot.slane %v1684, 4
  %v1686 = vmax.f32 %v1684, %v1685
  %v1687 = vrot.slane %v1686, 2
  %v1688 = vmax.f32 %v1686, %v1687
  %v1689 = vrot.slane %v1688, 1
  %v1690 = vmax.f32 %v1688, %v1689
  %v1691 = vsel %vm1340, %v1318, -inf
  %v1692 = vrot.slane %v1691, 4
  %v1693 = vmax.f32 %v1691, %v1692
  %v1694 = vrot.slane %v1693, 2
  %v1695 = vmax.f32 %v1693, %v1694
  %v1696 = vrot.slane %v1695, 1
  %v1697 = vmax.f32 %v1695, %v1696
  %v1698 = vsel %vm1340, %v1319, -inf
  %v1699 = vrot.slane %v1698, 4
  %v1700 = vmax.f32 %v1698, %v1699
  %v1701 = vrot.slane %v1700, 2
  %v1702 = vmax.f32 %v1700, %v1701
  %v1703 = vrot.slane %v1702, 1
  %v1704 = vmax.f32 %v1702, %v1703
  %v1705 = vsel %vm1340, %v1320, -inf
  %v1706 = vrot.slane %v1705, 4
  %v1707 = vmax.f32 %v1705, %v1706
  %v1708 = vrot.slane %v1707, 2
  %v1709 = vmax.f32 %v1707, %v1708
  %v1710 = vrot.slane %v1709, 1
  %v1711 = vmax.f32 %v1709, %v1710
  %v1712 = vsel %vm1340, %v1321, -inf
  %v1713 = vrot.slane %v1712, 4
  %v1714 = vmax.f32 %v1712, %v1713
  %v1715 = vrot.slane %v1714, 2
  %v1716 = vmax.f32 %v1714, %v1715
  %v1717 = vrot.slane %v1716, 1
  %v1718 = vmax.f32 %v1716, %v1717
  %v1719 = vsel %vm1340, %v1322, -inf
  %v1720 = vrot.slane %v1719, 4
  %v1721 = vmax.f32 %v1719, %v1720
  %v1722 = vrot.slane %v1721, 2
  %v1723 = vmax.f32 %v1721, %v1722
  %v1724 = vrot.slane %v1723, 1
  %v1725 = vmax.f32 %v1723, %v1724
  %v1726 = vsel %vm1340, %v1323, -inf
  %v1727 = vrot.slane %v1726, 4
  %v1728 = vmax.f32 %v1726, %v1727
  %v1729 = vrot.slane %v1728, 2
  %v1730 = vmax.f32 %v1728, %v1729
  %v1731 = vrot.slane %v1730, 1
  %v1732 = vmax.f32 %v1730, %v1731
  %v1733 = vsel %vm1340, %v1324, -inf
  %v1734 = vrot.slane %v1733, 4
  %v1735 = vmax.f32 %v1733, %v1734
  %v1736 = vrot.slane %v1735, 2
  %v1737 = vmax.f32 %v1735, %v1736
  %v1738 = vrot.slane %v1737, 1
  %v1739 = vmax.f32 %v1737, %v1738
  %v1740 = vsel %vm1340, %v1325, -inf
  %v1741 = vrot.slane %v1740, 4
  %v1742 = vmax.f32 %v1740, %v1741
  %v1743 = vrot.slane %v1742, 2
  %v1744 = vmax.f32 %v1742, %v1743
  %v1745 = vrot.slane %v1744, 1
  %v1746 = vmax.f32 %v1744, %v1745
  %v1747 = vsel %vm1340, %v1326, -inf
  %v1748 = vrot.slane %v1747, 4
  %v1749 = vmax.f32 %v1747, %v1748
  %v1750 = vrot.slane %v1749, 2
  %v1751 = vmax.f32 %v1749, %v1750
  %v1752 = vrot.slane %v1751, 1
  %v1753 = vmax.f32 %v1751, %v1752
  %v1754 = vsel %vm1340, %v1327, -inf
  %v1755 = vrot.slane %v1754, 4
  %v1756 = vmax.f32 %v1754, %v1755
  %v1757 = vrot.slane %v1756, 2
  %v1758 = vmax.f32 %v1756, %v1757
  %v1759 = vrot.slane %v1758, 1
  %v1760 = vmax.f32 %v1758, %v1759
  %v1761 = vsel %vm1340, %v1328, -inf
  %v1762 = vrot.slane %v1761, 4
  %v1763 = vmax.f32 %v1761, %v1762
  %v1764 = vrot.slane %v1763, 2
  %v1765 = vmax.f32 %v1763, %v1764
  %v1766 = vrot.slane %v1765, 1
  %v1767 = vmax.f32 %v1765, %v1766
  %v1768 = vsel %vm1340, %v1329, -inf
  %v1769 = vrot.slane %v1768, 4
  %v1770 = vmax.f32 %v1768, %v1769
  %v1771 = vrot.slane %v1770, 2
  %v1772 = vmax.f32 %v1770, %v1771
  %v1773 = vrot.slane %v1772, 1
  %v1774 = vmax.f32 %v1772, %v1773
  %v1775 = vsel %vm1340, %v1330, -inf
  %v1776 = vrot.slane %v1775, 4
  %v1777 = vmax.f32 %v1775, %v1776
  %v1778 = vrot.slane %v1777, 2
  %v1779 = vmax.f32 %v1777, %v1778
  %v1780 = vrot.slane %v1779, 1
  %v1781 = vmax.f32 %v1779, %v1780
  %v1782 = vsel %vm1340, %v1331, -inf
  %v1783 = vrot.slane %v1782, 4
  %v1784 = vmax.f32 %v1782, %v1783
  %v1785 = vrot.slane %v1784, 2
  %v1786 = vmax.f32 %v1784, %v1785
  %v1787 = vrot.slane %v1786, 1
  %v1788 = vmax.f32 %v1786, %v1787
  %v1789 = vsel %vm1340, %v1332, -inf
  %v1790 = vrot.slane %v1789, 4
  %v1791 = vmax.f32 %v1789, %v1790
  %v1792 = vrot.slane %v1791, 2
  %v1793 = vmax.f32 %v1791, %v1792
  %v1794 = vrot.slane %v1793, 1
  %v1795 = vmax.f32 %v1793, %v1794
  %v1796 = vsel %vm1340, %v1333, -inf
  %v1797 = vrot.slane %v1796, 4
  %v1798 = vmax.f32 %v1796, %v1797
  %v1799 = vrot.slane %v1798, 2
  %v1800 = vmax.f32 %v1798, %v1799
  %v1801 = vrot.slane %v1800, 1
  %v1802 = vmax.f32 %v1800, %v1801
  %v1803 = vsel %vm1340, %v1334, -inf
  %v1804 = vrot.slane %v1803, 4
  %v1805 = vmax.f32 %v1803, %v1804
  %v1806 = vrot.slane %v1805, 2
  %v1807 = vmax.f32 %v1805, %v1806
  %v1808 = vrot.slane %v1807, 1
  %v1809 = vmax.f32 %v1807, %v1808
  %v1810 = vsel %vm1340, %v1335, -inf
  %v1811 = vrot.slane %v1810, 4
  %v1812 = vmax.f32 %v1810, %v1811
  %v1813 = vrot.slane %v1812, 2
  %v1814 = vmax.f32 %v1812, %v1813
  %v1815 = vrot.slane %v1814, 1
  %v1816 = vmax.f32 %v1814, %v1815
  %v1817 = vsel %vm1340, %v1336, -inf
  %v1818 = vrot.slane %v1817, 4
  %v1819 = vmax.f32 %v1817, %v1818
  %v1820 = vrot.slane %v1819, 2
  %v1821 = vmax.f32 %v1819, %v1820
  %v1822 = vrot.slane %v1821, 1
  %v1823 = vmax.f32 %v1821, %v1822
  %v1824 = vsel %vm1340, %v1337, -inf
  %v1825 = vrot.slane %v1824, 4
  %v1826 = vmax.f32 %v1824, %v1825
  %v1827 = vrot.slane %v1826, 2
  %v1828 = vmax.f32 %v1826, %v1827
  %v1829 = vrot.slane %v1828, 1
  %v1830 = vmax.f32 %v1828, %v1829
  %v1831 = vsel %vm1340, %v1338, -inf
  %v1832 = vrot.slane %v1831, 4
  %v1833 = vmax.f32 %v1831, %v1832
  %v1834 = vrot.slane %v1833, 2
  %v1835 = vmax.f32 %v1833, %v1834
  %v1836 = vrot.slane %v1835, 1
  %v1837 = vmax.f32 %v1835, %v1836
  %v1838 = vsel %vm1340, %v1339, -inf
  %v1839 = vrot.slane %v1838, 4
  %v1840 = vmax.f32 %v1838, %v1839
  %v1841 = vrot.slane %v1840, 2
  %v1842 = vmax.f32 %v1840, %v1841
  %v1843 = vrot.slane %v1842, 1
  %v1844 = vmax.f32 %v1842, %v1843
  %vm1917 = vcmask 1041409
  %v1918 = vsel %vm1917, %v1354, %v1347
  %vm1919 = vcmask 1042434
  %v1920 = vsel %vm1919, %v1361, %v1918
  %vm1921 = vcmask 1043459
  %v1922 = vsel %vm1921, %v1368, %v1920
  %vm1923 = vcmask 1044484
  %v1924 = vsel %vm1923, %v1375, %v1922
  %vm1925 = vcmask 1045509
  %v1926 = vsel %vm1925, %v1382, %v1924
  %vm1927 = vcmask 1046534
  %v1928 = vsel %vm1927, %v1389, %v1926
  %vm1929 = vcmask 1047559
  %v1930 = vsel %vm1929, %v1396, %v1928
  %v1931 = vsel %vm1917, %v1410, %v1403
  %v1932 = vsel %vm1919, %v1417, %v1931
  %v1933 = vsel %vm1921, %v1424, %v1932
  %v1934 = vsel %vm1923, %v1431, %v1933
  %v1935 = vsel %vm1925, %v1438, %v1934
  %v1936 = vsel %vm1927, %v1445, %v1935
  %v1937 = vsel %vm1929, %v1452, %v1936
  %v1938 = vsel %vm1917, %v1466, %v1459
  %v1939 = vsel %vm1919, %v1473, %v1938
  %v1940 = vsel %vm1921, %v1480, %v1939
  %v1941 = vsel %vm1923, %v1487, %v1940
  %v1942 = vsel %vm1925, %v1494, %v1941
  %v1943 = vsel %vm1927, %v1501, %v1942
  %v1944 = vsel %vm1929, %v1508, %v1943
  %v1945 = vsel %vm1917, %v1522, %v1515
  %v1946 = vsel %vm1919, %v1529, %v1945
  %v1947 = vsel %vm1921, %v1536, %v1946
  %v1948 = vsel %vm1923, %v1543, %v1947
  %v1949 = vsel %vm1925, %v1550, %v1948
  %v1950 = vsel %vm1927, %v1557, %v1949
  %v1951 = vsel %vm1929, %v1564, %v1950
  %v1952 = vsel %vm1917, %v1578, %v1571
  %v1953 = vsel %vm1919, %v1585, %v1952
  %v1954 = vsel %vm1921, %v1592, %v1953
  %v1955 = vsel %vm1923, %v1599, %v1954
  %v1956 = vsel %vm1925, %v1606, %v1955
  %v1957 = vsel %vm1927, %v1613, %v1956
  %v1958 = vsel %vm1929, %v1620, %v1957
  %v1959 = vsel %vm1917, %v1634, %v1627
  %v1960 = vsel %vm1919, %v1641, %v1959
  %v1961 = vsel %vm1921, %v1648, %v1960
  %v1962 = vsel %vm1923, %v1655, %v1961
  %v1963 = vsel %vm1925, %v1662, %v1962
  %v1964 = vsel %vm1927, %v1669, %v1963
  %v1965 = vsel %vm1929, %v1676, %v1964
  %v1966 = vsel %vm1917, %v1690, %v1683
  %v1967 = vsel %vm1919, %v1697, %v1966
  %v1968 = vsel %vm1921, %v1704, %v1967
  %v1969 = vsel %vm1923, %v1711, %v1968
  %v1970 = vsel %vm1925, %v1718, %v1969
  %v1971 = vsel %vm1927, %v1725, %v1970
  %v1972 = vsel %vm1929, %v1732, %v1971
  %v1973 = vsel %vm1917, %v1746, %v1739
  %v1974 = vsel %vm1919, %v1753, %v1973
  %v1975 = vsel %vm1921, %v1760, %v1974
  %v1976 = vsel %vm1923, %v1767, %v1975
  %v1977 = vsel %vm1925, %v1774, %v1976
  %v1978 = vsel %vm1927, %v1781, %v1977
  %v1979 = vsel %vm1929, %v1788, %v1978
  %v1980 = vsel %vm1917, %v1802, %v1795
  %v1981 = vsel %vm1919, %v1809, %v1980
  %v1982 = vsel %vm1921, %v1816, %v1981
  %v1983 = vsel %vm1923, %v1823, %v1982
  %v1984 = vsel %vm1925, %v1830, %v1983
  %v1985 = vsel %vm1927, %v1837, %v1984
  %v1986 = vsel %vm1929, %v1844, %v1985
  %1996 = vst.msk [vmem:[%s5] sm:$0xff] %vm1340, %v1930
  %1997 = vst.msk [vmem:[%s5 + $0x8] sm:$0xff] %vm1340, %v1937
  %1998 = vst.msk [vmem:[%s5 + $0x10] sm:$0xff] %vm1340, %v1944
  %1999 = vst.msk [vmem:[%s5 + $0x18] sm:$0xff] %vm1340, %v1951
  %2000 = vst.msk [vmem:[%s5 + $0x20] sm:$0xff] %vm1340, %v1958
  %2001 = vst.msk [vmem:[%s5 + $0x28] sm:$0xff] %vm1340, %v1965
  %2002 = vst.msk [vmem:[%s5 + $0x30] sm:$0xff] %vm1340, %v1972
  %2003 = vst.msk [vmem:[%s5 + $0x38] sm:$0xff] %vm1340, %v1979
  %2004 = vst.msk [vmem:[%s5 + $0x40] sm:$0xff] %vm1340, %v1986
  // Predicated region
  $region22: #{tpu_custom_call.1} parent=0 // pred_check
    _
  $region23: #{tpu_custom_call.1} parent=0 // pred_check_branch
    %2006 = sbr.rel (0) target = $region25
  $region24: #{tpu_custom_call.1} parent=0 // pred_region
    _
  $region25: #{tpu_custom_call.1} parent=0 // pred_fallthru
    _
  // Predicated region
  $region26: #{tpu_custom_call.1} parent=0 // pred_check
    _
  $region27: #{tpu_custom_call.1} parent=0 // pred_check_branch
    %2008 = sbr.rel (0) target = $region29
  $region28: #{tpu_custom_call.1} parent=0 // pred_region
    _
  $region29: #{tpu_custom_call.1} parent=0 // pred_fallthru
    _

</llo_original>
